<compile_context>
chip_gen: v6e
topology: v6e:2x2x1
jax: 0.10.0
libtpu: 0.0.40
codegen_flags: <defaults>
</compile_context>

<pallas_src>
import functools
import math

import jax
import jax.numpy as jnp
from jax.experimental import pallas as pl
from jax.experimental.pallas import tpu as pltpu


# ----------------------------------------------------------------------------
# Fused Pallas kernel: decoder stack + projector + similarity/loss epilogue
# ----------------------------------------------------------------------------
def _rmsnorm(x, gain, inv_dim, eps=1e-6):
    # padded lanes of x are zero, so summing and dividing by the REAL hidden
    # size gives the exact unpadded RMSNorm.
    var = jnp.sum(x * x, axis=-1, keepdims=True) * inv_dim
    return x * jax.lax.rsqrt(var + eps) * gain


def _fused_compressor_kernel(real_h,
                             x_in_ref, bias_ref, qpool_ref,
                             g1_ref, wqkv_ref, wo_ref, g2_ref, wgu_ref, wd_ref,
                             clips_ref, wproj_ref, bproj_ref,
                             gpool_ref, selm_ref, labels_ref,
                             y_ref, cemb_ref, gmem_ref, sim_ref, loss_ref,
                             xs_ref):
    """Grid axis 0 = decoder layer.  Hidden state lives in xs_ref (VMEM)."""
    l = pl.program_id(0)
    n_layers = pl.num_programs(0)
    inv_h = 1.0 / float(real_h)
    scale = 1.0 / math.sqrt(float(real_h))
    Hp = x_in_ref.shape[1]          # padded hidden (lane-dense, 128-multiple)
    Fp = wd_ref.shape[1]            # padded FFN

    # Load the embedded tokens once; keep hidden state resident across layers.
    @pl.when(l == 0)
    def _():
        xs_ref[...] = x_in_ref[...]

    x = xs_ref[...]                                                  # (M, Hp) f32

    # ---------------- attention block ----------------
    h = _rmsnorm(x, g1_ref[0], inv_h)
    qkv = jnp.dot(h.astype(jnp.bfloat16), wqkv_ref[0],
                  preferred_element_type=jnp.float32)                # (M, 3Hp)
    q = qkv[:, :Hp]
    k = qkv[:, Hp:2 * Hp]
    v = qkv[:, 2 * Hp:]

    scores = jax.lax.dot_general(q, k, (((1,), (1,)), ((), ())),
                                 preferred_element_type=jnp.float32)  # (M, M)
    scores = scores * scale + bias_ref[...]      # block-diag causal + key mask
    smax = jnp.max(scores, axis=-1, keepdims=True)
    ez = jnp.exp(scores - smax)
    p = ez * pl.reciprocal(jnp.sum(ez, axis=-1, keepdims=True), approx=True)
    attn = jnp.dot(p, v, preferred_element_type=jnp.float32)          # (M, Hp)
    x2 = x + jnp.dot(attn.astype(jnp.bfloat16), wo_ref[0],
                     preferred_element_type=jnp.float32)

    # ---------------- SwiGLU MLP (fused gate+up) ----------------
    h2 = _rmsnorm(x2, g2_ref[0], inv_h)
    gu = jnp.dot(h2.astype(jnp.bfloat16), wgu_ref[0],
                 preferred_element_type=jnp.float32)                  # (M, 2Fp)
    gate = gu[:, :Fp]
    up = gu[:, Fp:]
    act = gate * jax.nn.sigmoid(gate) * up                            # SiLU * up
    y = x2 + jnp.dot(act.astype(jnp.bfloat16), wd_ref[0],
                     preferred_element_type=jnp.float32)              # (M, Hp)

    xs_ref[...] = y

    # ---------------- epilogue: only on the last layer ----------------
    @pl.when(l == n_layers - 1)
    def _():
        y_ref[...] = y.astype(y_ref.dtype)

        # question masked-mean pooling (weights pre-normalized in the wrapper)
        q_pooled = jnp.dot(qpool_ref[...], y,
                           preferred_element_type=jnp.float32)        # (B, Hp)

        # clip projector + global memory
        ce = jnp.dot(clips_ref[...].astype(jnp.bfloat16), wproj_ref[...],
                     preferred_element_type=jnp.float32) + bproj_ref[...]
        cemb_ref[...] = ce.astype(cemb_ref.dtype)                     # (BN, Hp)
        gmem_ref[...] = jnp.dot(gpool_ref[...], ce,
                                preferred_element_type=jnp.float32
                                ).astype(gmem_ref.dtype)              # (B, Hp)

        # cosine similarity(question, clips) + MSE grounding loss
        eps = 1e-6
        qn = q_pooled * jax.lax.rsqrt(
            jnp.sum(q_pooled * q_pooled, axis=-1, keepdims=True) + eps)
        cn = ce * jax.lax.rsqrt(jnp.sum(ce * ce, axis=-1, keepdims=True) + eps)
        q_rows = jnp.dot(selm_ref[...], qn,
                         preferred_element_type=jnp.float32)          # (BN, Hp)
        sim = jnp.sum(cn * q_rows, axis=-1, keepdims=True)            # (BN, 1)
        sim_ref[...] = sim.astype(sim_ref.dtype)
        diff = sim - labels_ref[...]
        loss_ref[...] = jnp.mean(diff * diff).reshape(1, 1).astype(loss_ref.dtype)


def _fused_forward(x_in, bias, qpool, g1, wqkv, wo, g2, wgu, wd,
                   clips_flat, w_proj, b_proj, gpool, selm, labels_flat,
                   real_h):
    L = g1.shape[0]
    M, Hp = x_in.shape
    B = qpool.shape[0]
    BN, Dcp = clips_flat.shape
    Fp = wd.shape[1]
    H3 = wqkv.shape[2]
    F2 = wgu.shape[2]

    kernel = functools.partial(_fused_compressor_kernel, real_h)

    return pl.pallas_call(
        kernel,
        grid=(L,),
        in_specs=[
            pl.BlockSpec((M, Hp), lambda l: (0, 0)),            # x_in (resident)
            pl.BlockSpec((M, M), lambda l: (0, 0)),             # attention bias
            pl.BlockSpec((B, M), lambda l: (0, 0)),             # question pool w
            pl.BlockSpec((1, 1, Hp), lambda l: (l, 0, 0)),      # g1
            pl.BlockSpec((1, Hp, H3), lambda l: (l, 0, 0)),     # wqkv
            pl.BlockSpec((1, Hp, Hp), lambda l: (l, 0, 0)),     # wo
            pl.BlockSpec((1, 1, Hp), lambda l: (l, 0, 0)),      # g2
            pl.BlockSpec((1, Hp, F2), lambda l: (l, 0, 0)),     # w_gate|w_up
            pl.BlockSpec((1, Fp, Hp), lambda l: (l, 0, 0)),     # w_down
            pl.BlockSpec((BN, Dcp), lambda l: (0, 0)),          # clips (flat)
            pl.BlockSpec((Dcp, Hp), lambda l: (0, 0)),          # w_proj
            pl.BlockSpec((1, Hp), lambda l: (0, 0)),            # b_proj
            pl.BlockSpec((B, BN), lambda l: (0, 0)),            # gmem pool w
            pl.BlockSpec((BN, B), lambda l: (0, 0)),            # batch selector
            pl.BlockSpec((BN, 1), lambda l: (0, 0)),            # time labels
        ],
        out_specs=[
            pl.BlockSpec((M, Hp), lambda l: (0, 0)),            # decoder out
            pl.BlockSpec((BN, Hp), lambda l: (0, 0)),           # clip embeds
            pl.BlockSpec((B, Hp), lambda l: (0, 0)),            # global memory
            pl.BlockSpec((BN, 1), lambda l: (0, 0)),            # similarity
            pl.BlockSpec((1, 1), lambda l: (0, 0)),             # loss
        ],
        out_shape=[
            jax.ShapeDtypeStruct((M, Hp), jnp.float32),
            jax.ShapeDtypeStruct((BN, Hp), jnp.float32),
            jax.ShapeDtypeStruct((B, Hp), jnp.float32),
            jax.ShapeDtypeStruct((BN, 1), jnp.float32),
            jax.ShapeDtypeStruct((1, 1), jnp.float32),
        ],
        scratch_shapes=[pltpu.VMEM((M, Hp), jnp.float32)],      # resident hidden
        compiler_params=pltpu.CompilerParams(
            dimension_semantics=("arbitrary",)),                # layer axis is sequential
    )(x_in, bias, qpool, g1, wqkv, wo, g2, wgu, wd,
      clips_flat, w_proj, b_proj, gpool, selm, labels_flat)


# ----------------------------------------------------------------------------
# Module-equivalent wrapper
# ----------------------------------------------------------------------------
class StreamQwenCompressorPallas:
    """Synthetic stand-in for StreamQwenCompressor (forward semantics)."""

    def __init__(self, key, vocab=64, hidden=32, ffn=64, clip_dim=48,
                 n_layers=2):
        self.hidden_size = hidden
        self.ffn = ffn
        self.clip_dim = clip_dim
        self.n_layers = n_layers
        self.select_layer = 100          # kept for parity with the reference

        Hp = self._rup(hidden, 128)
        Fp = self._rup(ffn, 128)
        Dcp = self._rup(clip_dim, 128)
        self.Hp, self.Fp, self.Dcp = Hp, Fp, Dcp

        s = 0.02
        keys = iter(jax.random.split(key, 2 + 5 * n_layers))

        emb = s * jax.random.normal(next(keys), (vocab, hidden), jnp.float32)
        self.embed = jnp.zeros((vocab, Hp), jnp.float32).at[:, :hidden].set(emb)

        wqkvs, wos, wgus, wds = [], [], [], []
        for _ in range(n_layers):
            wqkv = s * jax.random.normal(next(keys), (hidden, 3 * hidden), jnp.float32)
            wq, wk, wv = (wqkv[:, :hidden], wqkv[:, hidden:2 * hidden],
                          wqkv[:, 2 * hidden:])
            wqkvs.append(jnp.concatenate([self._pad2(wq, Hp, Hp),
                                          self._pad2(wk, Hp, Hp),
                                          self._pad2(wv, Hp, Hp)], axis=1))
            wo = s * jax.random.normal(next(keys), (hidden, hidden), jnp.float32)
            wos.append(self._pad2(wo, Hp, Hp))
            wg = s * jax.random.normal(next(keys), (hidden, ffn), jnp.float32)
            wu = s * jax.random.normal(next(keys), (hidden, ffn), jnp.float32)
            wgus.append(jnp.concatenate([self._pad2(wg, Hp, Fp),
                                         self._pad2(wu, Hp, Fp)], axis=1))
            wd = s * jax.random.normal(next(keys), (ffn, hidden), jnp.float32)
            wds.append(self._pad2(wd, Fp, Hp))

        # RMSNorm gains: ones on real lanes, zeros on padded lanes (keeps
        # padded hidden lanes exactly zero through every layer).
        gain = jnp.zeros((n_layers, 1, Hp), jnp.float32).at[:, :, :hidden].set(1.0)
        self.g1 = gain
        self.g2 = gain
        self.wqkv = jnp.stack(wqkvs).astype(jnp.bfloat16)      # (L, Hp, 3Hp)
        self.wo = jnp.stack(wos).astype(jnp.bfloat16)          # (L, Hp, Hp)
        self.wgu = jnp.stack(wgus).astype(jnp.bfloat16)        # (L, Hp, 2Fp)
        self.wd = jnp.stack(wds).astype(jnp.bfloat16)          # (L, Fp, Hp)

        wp = s * jax.random.normal(next(keys), (clip_dim, hidden), jnp.float32)
        self.w_proj = self._pad2(wp, Dcp, Hp).astype(jnp.bfloat16)
        self.b_proj = jnp.zeros((1, Hp), jnp.float32)

        self._fwd = jax.jit(self._forward)

    # -- small helpers -------------------------------------------------------
    @staticmethod
    def _rup(n, m):
        return ((n + m - 1) // m) * m

    @staticmethod
    def _pad2(w, r, c):
        return jnp.zeros((r, c), w.dtype).at[:w.shape[0], :w.shape[1]].set(w)

    # -- traced forward (arrays only) ---------------------------------------
    def _forward(self, clips, seqs, compress_mask, qs, qs_mask, time_labels):
        B, T = seqs.shape
        Tq = qs.shape[1]
        N = clips.shape[1]
        H, Hp, Dcp = self.hidden_size, self.Hp, self.Dcp

        Tqp = self._rup(Tq, 8)                 # pad question length for tiling
        M = B * T + B * Tqp                    # flattened token count (both paths)

        # token embedding in padded-hidden space, both paths stacked on M axis
        seq_emb = jnp.take(self.embed, seqs, axis=0).reshape(B * T, Hp)
        qs_pad = jnp.pad(qs, ((0, 0), (0, Tqp - Tq)))
        qs_emb = jnp.take(self.embed, qs_pad, axis=0).reshape(B * Tqp, Hp)
        x_in = jnp.concatenate([seq_emb, qs_emb], axis=0).astype(jnp.float32)

        # block-diagonal causal + key-validity attention bias (hoisted here,
        # loop-invariant across layers)
        cmask = compress_mask.astype(jnp.float32)
        qmask = qs_mask.astype(jnp.float32)
        qmask_p = jnp.pad(qmask, ((0, 0), (0, Tqp - Tq)))
        seg = jnp.concatenate([jnp.repeat(jnp.arange(B), T),
                               B + jnp.repeat(jnp.arange(B), Tqp)])
        pos = jnp.concatenate([jnp.tile(jnp.arange(T), B),
                               jnp.tile(jnp.arange(Tqp), B)])
        val = jnp.concatenate([cmask.reshape(-1), qmask_p.reshape(-1)])
        ok = ((seg[:, None] == seg[None, :])
              & (pos[None, :] <= pos[:, None])
              & (val[None, :] > 0.5))
        bias = jnp.where(ok, 0.0, -1e30).astype(jnp.float32)          # (M, M)

        # pre-normalized masked-mean pooling weights for the question path
        eye = jnp.eye(B, dtype=jnp.float32)
        qden = jnp.maximum(jnp.sum(qmask, axis=1, keepdims=True), 1.0)
        qw = qmask_p / qden                                           # (B, Tqp)
        qpool_q = (eye[:, :, None] * qw[:, None, :]).reshape(B, B * Tqp)
        qpool = jnp.concatenate(
            [jnp.zeros((B, B * T), jnp.float32), qpool_q], axis=1)    # (B, M)

        # clip projector operands (flattened, lane-dense)
        clips_flat = jnp.pad(
            clips.astype(jnp.float32),
            ((0, 0), (0, 0), (0, Dcp - clips.shape[2]))).reshape(B * N, Dcp)
        gpool = (eye[:, :, None] *
                 jnp.full((1, 1, N), 1.0 / N, jnp.float32)).reshape(B, B * N)
        selm = (eye[:, :, None] *
                jnp.ones((1, 1, N), jnp.float32)).reshape(B, B * N).T  # (BN, B)
        labels_flat = time_labels.astype(jnp.float32).reshape(B * N, 1)

        y, cemb, gmem, sim_flat, loss = _fused_forward(
            x_in, bias, qpool,
            self.g1, self.wqkv, self.wo, self.g2, self.wgu, self.wd,
            clips_flat, self.w_proj, self.b_proj, gpool, selm, labels_flat,
            self.hidden_size)

        compress_tokens = y[:B * T].reshape(B, T, Hp)[:, :, :H]
        clip_embeds = cemb.reshape(B, N, Hp)[:, :, :H]
        global_memory = gmem[:, :H]
        similarity = sim_flat.reshape(B, N)
        return compress_tokens, clip_embeds, global_memory, loss[0, 0], similarity

    # -- public interface (parity with the reference forward) ---------------
    def __call__(self, clips, clips_large, seqs, compress_mask, qs, qs_mask,
                 time_labels, ans_token, todo_token, insert_position,
                 ans_position, silent_position):
        # clips_large is accepted but unused: forward_compress() in the
        # reference never forwards images_large to forward_token.
        del clips_large
        # TODO(synk): ans_token / todo_token insertion, insert_position /
        # ans_position / silent_position handling and select_layer hidden-state
        # selection live inside the pretrained StreamGroundQwenForCausalLM and
        # cannot be reproduced without the checkpoint; accepted for interface
        # parity only.
        del ans_token, todo_token, insert_position, ans_position, silent_position
        return self._fwd(clips, seqs, compress_mask, qs, qs_mask, time_labels)


# ----------------------------------------------------------------------------
# Driver
# ----------------------------------------------------------------------------
if __name__ == "__main__":
    key = jax.random.PRNGKey(0)
    kp, kc, kcl, ks, kq, kt = jax.random.split(key, 6)

    B, T, Tq, N, Dc = 2, 8, 6, 4, 48
    VOCAB, H, F = 64, 32, 64

    model = StreamQwenCompressorPallas(kp, vocab=VOCAB, hidden=H, ffn=F,
                                       clip_dim=Dc, n_layers=2)

    clips = jax.random.normal(kc, (B, N, Dc), jnp.float32)
    clips_large = jax.random.normal(kcl, (B, N, 2 * Dc), jnp.float32)
    seqs = jax.random.randint(ks, (B, T), 0, VOCAB)
    compress_mask = jnp.array([[1, 1, 1, 1, 1, 1, 1, 1],
                               [1, 1, 1, 1, 1, 1, 0, 0]], jnp.float32)
    qs = jax.random.randint(kq, (B, Tq), 0, VOCAB)
    qs_mask = jnp.array([[1, 1, 1, 1, 1, 0],
                         [1, 1, 1, 1, 1, 1]], jnp.float32)
    time_labels = jax.random.uniform(kt, (B, N), jnp.float32)
    ans_token = jnp.array([5], jnp.int32)
    todo_token = jnp.array([6], jnp.int32)
    insert_position = 3
    ans_position = [2]
    silent_position = [1]

    outs = model(clips, clips_large, seqs, compress_mask, qs, qs_mask,
                 time_labels, ans_token, todo_token, insert_position,
                 ans_position, silent_position)
    outs = jax.block_until_ready(outs)

    compress_tokens, clip_embeds, global_memory, loss, similarity = outs
    assert compress_tokens.shape == (B, T, H)
    assert clip_embeds.shape == (B, N, H)
    assert global_memory.shape == (B, H)
    assert loss.shape == ()
    assert similarity.shape == (B, N)
    assert all(bool(jnp.all(jnp.isfinite(o))) for o in
               (compress_tokens, clip_embeds, global_memory, loss, similarity))
    print("KERNEL_OK")
</pallas_src>

<mosaic_0001>
module attributes {stable_mosaic.version = 11 : i64} {
  func.func @_fused_compressor_kernel(%arg0: i32, %arg1: memref<32x128xf32, #tpu.memory_space<vmem>>, %arg2: memref<32x32xf32, #tpu.memory_space<vmem>>, %arg3: memref<2x32xf32, #tpu.memory_space<vmem>>, %arg4: memref<1x1x128xf32, #tpu.memory_space<vmem>>, %arg5: memref<1x128x384xbf16, #tpu.memory_space<vmem>>, %arg6: memref<1x128x128xbf16, #tpu.memory_space<vmem>>, %arg7: memref<1x1x128xf32, #tpu.memory_space<vmem>>, %arg8: memref<1x128x256xbf16, #tpu.memory_space<vmem>>, %arg9: memref<1x128x128xbf16, #tpu.memory_space<vmem>>, %arg10: memref<8x128xf32, #tpu.memory_space<vmem>>, %arg11: memref<128x128xbf16, #tpu.memory_space<vmem>>, %arg12: memref<1x128xf32, #tpu.memory_space<vmem>>, %arg13: memref<2x8xf32, #tpu.memory_space<vmem>>, %arg14: memref<8x2xf32, #tpu.memory_space<vmem>>, %arg15: memref<8x1xf32, #tpu.memory_space<vmem>>, %arg16: memref<32x128xf32, #tpu.memory_space<vmem>>, %arg17: memref<8x128xf32, #tpu.memory_space<vmem>>, %arg18: memref<2x128xf32, #tpu.memory_space<vmem>>, %arg19: memref<8x1xf32, #tpu.memory_space<vmem>>, %arg20: memref<1x1xf32, #tpu.memory_space<vmem>>, %arg21: memref<32x128xf32, #tpu.memory_space<vmem>>) attributes {dimension_semantics = [#tpu.dimension_semantics<arbitrary>], iteration_bounds = array<i64: 2>, scalar_prefetch = 0 : i64, scratch_operands = 1 : i64, tpu.core_type = #tpu.core_type<tc>, window_params = [{pipeline_mode = #tpu.pipeline_mode<synchronous>, transform_indices = @transform_0, window_bounds = array<i64: 32, 128>}, {pipeline_mode = #tpu.pipeline_mode<synchronous>, transform_indices = @transform_1, window_bounds = array<i64: 32, 32>}, {pipeline_mode = #tpu.pipeline_mode<synchronous>, transform_indices = @transform_2, window_bounds = array<i64: 2, 32>}, {transform_indices = @transform_3, window_bounds = array<i64: 1, 1, 128>}, {transform_indices = @transform_4, window_bounds = array<i64: 1, 128, 384>}, {transform_indices = @transform_5, window_bounds = array<i64: 1, 128, 128>}, {transform_indices = @transform_6, window_bounds = array<i64: 1, 1, 128>}, {transform_indices = @transform_7, window_bounds = array<i64: 1, 128, 256>}, {transform_indices = @transform_8, window_bounds = array<i64: 1, 128, 128>}, {pipeline_mode = #tpu.pipeline_mode<synchronous>, transform_indices = @transform_9, window_bounds = array<i64: 8, 128>}, {pipeline_mode = #tpu.pipeline_mode<synchronous>, transform_indices = @transform_10, window_bounds = array<i64: 128, 128>}, {pipeline_mode = #tpu.pipeline_mode<synchronous>, transform_indices = @transform_11, window_bounds = array<i64: 1, 128>}, {pipeline_mode = #tpu.pipeline_mode<synchronous>, transform_indices = @transform_12, window_bounds = array<i64: 2, 8>}, {pipeline_mode = #tpu.pipeline_mode<synchronous>, transform_indices = @transform_13, window_bounds = array<i64: 8, 2>}, {pipeline_mode = #tpu.pipeline_mode<synchronous>, transform_indices = @transform_14, window_bounds = array<i64: 8, 1>}, {pipeline_mode = #tpu.pipeline_mode<synchronous>, transform_indices = @transform_15, window_bounds = array<i64: 32, 128>}, {pipeline_mode = #tpu.pipeline_mode<synchronous>, transform_indices = @transform_16, window_bounds = array<i64: 8, 128>}, {pipeline_mode = #tpu.pipeline_mode<synchronous>, transform_indices = @transform_17, window_bounds = array<i64: 2, 128>}, {pipeline_mode = #tpu.pipeline_mode<synchronous>, transform_indices = @transform_18, window_bounds = array<i64: 8, 1>}, {pipeline_mode = #tpu.pipeline_mode<synchronous>, transform_indices = @transform_19, window_bounds = array<i64: 1, 1>}]} {
    %c0_i32 = arith.constant 0 : i32
    %0 = arith.cmpi eq, %arg0, %c0_i32 : i32
    %1 = arith.extui %0 : i1 to i32
    %c0_i32_0 = arith.constant 0 : i32
    %2 = arith.cmpi ne, %1, %c0_i32_0 : i32
    scf.if %2 {
      %c0_40 = arith.constant 0 : index
      %c0_41 = arith.constant 0 : index
      %82 = vector.load %arg1[%c0_40, %c0_41] : memref<32x128xf32, #tpu.memory_space<vmem>>, vector<32x128xf32>
      %c0_42 = arith.constant 0 : index
      %c0_43 = arith.constant 0 : index
      %83 = vector.load %arg21[%c0_42, %c0_43] : memref<32x128xf32, #tpu.memory_space<vmem>>, vector<32x128xf32>
      tpu.vector_store %arg21[%c0_42, %c0_43], %82 {strides = array<i32>} : memref<32x128xf32, #tpu.memory_space<vmem>>, vector<32x128xf32>,
    } else {
    }
    %c0 = arith.constant 0 : index
    %c0_1 = arith.constant 0 : index
    %3 = vector.load %arg21[%c0, %c0_1] : memref<32x128xf32, #tpu.memory_space<vmem>>, vector<32x128xf32>
    %c0_2 = arith.constant 0 : index
    %c0_3 = arith.constant 0 : index
    %c0_4 = arith.constant 0 : index
    %4 = vector.load %arg4[%c0_2, %c0_3, %c0_4] : memref<1x1x128xf32, #tpu.memory_space<vmem>>, vector<1x1x128xf32>
    %5 = vector.shape_cast %4 : vector<1x1x128xf32> to vector<1x128xf32>
    %6 = arith.mulf %3, %3 : vector<32x128xf32>
    %cst = arith.constant dense<0.000000e+00> : vector<32xf32>
    %7 = vector.multi_reduction <add>, %6, %cst [1] : vector<32x128xf32> to vector<32xf32>
    %8 = vector.shape_cast %7 : vector<32xf32> to vector<32x1xf32>
    %cst_5 = arith.constant 3.125000e-02 : f32
    %9 = vector.broadcast %cst_5 : f32 to vector<32x1xf32>
    %10 = arith.mulf %8, %9 : vector<32x1xf32>
    %cst_6 = arith.constant 9.99999997E-7 : f32
    %11 = vector.broadcast %cst_6 : f32 to vector<32x1xf32>
    %12 = arith.addf %10, %11 : vector<32x1xf32>
    %13 = math.rsqrt %12 : vector<32x1xf32>
    %14 = vector.broadcast %13 : vector<32x1xf32> to vector<32x128xf32>
    %15 = arith.mulf %3, %14 : vector<32x128xf32>
    %16 = vector.broadcast %5 : vector<1x128xf32> to vector<32x128xf32>
    %17 = arith.mulf %15, %16 : vector<32x128xf32>
    %18 = arith.truncf %17 : vector<32x128xf32> to vector<32x128xbf16>
    %c0_7 = arith.constant 0 : index
    %c0_8 = arith.constant 0 : index
    %c0_9 = arith.constant 0 : index
    %19 = vector.load %arg5[%c0_7, %c0_8, %c0_9] : memref<1x128x384xbf16, #tpu.memory_space<vmem>>, vector<1x128x384xbf16>
    %20 = vector.shape_cast %19 : vector<1x128x384xbf16> to vector<128x384xbf16>
    %cst_10 = arith.constant dense<0.000000e+00> : vector<32x384xf32>
    %21 = tpu.matmul %18, %20, %cst_10 {dimension_numbers = #tpu.dot_dimension_numbers<[1], [0], [0], [1], [0, 0, 1, 1], [], []>} : vector<32x128xbf16>, vector<128x384xbf16>, vector<32x384xf32> -> vector<32x384xf32>
    %22 = vector.extract_strided_slice %21 {offsets = [0, 0], sizes = [32, 128], strides = [1, 1]} : vector<32x384xf32> to vector<32x128xf32>
    %23 = vector.extract_strided_slice %21 {offsets = [0, 128], sizes = [32, 128], strides = [1, 1]} : vector<32x384xf32> to vector<32x128xf32>
    %24 = vector.extract_strided_slice %21 {offsets = [0, 256], sizes = [32, 128], strides = [1, 1]} : vector<32x384xf32> to vector<32x128xf32>
    %cst_11 = arith.constant dense<0.000000e+00> : vector<32x32xf32>
    %25 = tpu.matmul %22, %23, %cst_11 {dimension_numbers = #tpu.dot_dimension_numbers<[1], [1], [0], [0], [0, 0, 1, 0], [], []>} : vector<32x128xf32>, vector<32x128xf32>, vector<32x32xf32> -> vector<32x32xf32>
    %cst_12 = arith.constant 0.176776692 : f32
    %26 = vector.broadcast %cst_12 : f32 to vector<32x32xf32>
    %27 = arith.mulf %25, %26 : vector<32x32xf32>
    %c0_13 = arith.constant 0 : index
    %c0_14 = arith.constant 0 : index
    %28 = vector.load %arg2[%c0_13, %c0_14] : memref<32x32xf32, #tpu.memory_space<vmem>>, vector<32x32xf32>
    %29 = arith.addf %27, %28 : vector<32x32xf32>
    %cst_15 = arith.constant dense<0xFF800000> : vector<32xf32>
    %30 = vector.multi_reduction <maximumf>, %29, %cst_15 [1] : vector<32x32xf32> to vector<32xf32>
    %31 = vector.shape_cast %30 : vector<32xf32> to vector<32x1xf32>
    %32 = vector.broadcast %31 : vector<32x1xf32> to vector<32x32xf32>
    %33 = arith.subf %29, %32 : vector<32x32xf32>
    %34 = math.exp %33 : vector<32x32xf32>
    %cst_16 = arith.constant dense<0.000000e+00> : vector<32xf32>
    %35 = vector.multi_reduction <add>, %34, %cst_16 [1] : vector<32x32xf32> to vector<32xf32>
    %36 = vector.shape_cast %35 : vector<32xf32> to vector<32x1xf32>
    %37 = tpu.reciprocal %36 {approx = true} : vector<32x1xf32> -> vector<32x1xf32>
    %38 = vector.broadcast %37 : vector<32x1xf32> to vector<32x32xf32>
    %39 = arith.mulf %34, %38 : vector<32x32xf32>
    %cst_17 = arith.constant dense<0.000000e+00> : vector<32x128xf32>
    %40 = tpu.matmul %39, %24, %cst_17 {dimension_numbers = #tpu.dot_dimension_numbers<[1], [0], [0], [1], [0, 0, 1, 1], [], []>} : vector<32x32xf32>, vector<32x128xf32>, vector<32x128xf32> -> vector<32x128xf32>
    %41 = arith.truncf %40 : vector<32x128xf32> to vector<32x128xbf16>
    %c0_18 = arith.constant 0 : index
    %c0_19 = arith.constant 0 : index
    %c0_20 = arith.constant 0 : index
    %42 = vector.load %arg6[%c0_18, %c0_19, %c0_20] : memref<1x128x128xbf16, #tpu.memory_space<vmem>>, vector<1x128x128xbf16>
    %43 = vector.shape_cast %42 : vector<1x128x128xbf16> to vector<128x128xbf16>
    %cst_21 = arith.constant dense<0.000000e+00> : vector<32x128xf32>
    %44 = tpu.matmul %41, %43, %cst_21 {dimension_numbers = #tpu.dot_dimension_numbers<[1], [0], [0], [1], [0, 0, 1, 1], [], []>} : vector<32x128xbf16>, vector<128x128xbf16>, vector<32x128xf32> -> vector<32x128xf32>
    %45 = arith.addf %3, %44 : vector<32x128xf32>
    %c0_22 = arith.constant 0 : index
    %c0_23 = arith.constant 0 : index
    %c0_24 = arith.constant 0 : index
    %46 = vector.load %arg7[%c0_22, %c0_23, %c0_24] : memref<1x1x128xf32, #tpu.memory_space<vmem>>, vector<1x1x128xf32>
    %47 = vector.shape_cast %46 : vector<1x1x128xf32> to vector<1x128xf32>
    %48 = arith.mulf %45, %45 : vector<32x128xf32>
    %cst_25 = arith.constant dense<0.000000e+00> : vector<32xf32>
    %49 = vector.multi_reduction <add>, %48, %cst_25 [1] : vector<32x128xf32> to vector<32xf32>
    %50 = vector.shape_cast %49 : vector<32xf32> to vector<32x1xf32>
    %cst_26 = arith.constant 3.125000e-02 : f32
    %51 = vector.broadcast %cst_26 : f32 to vector<32x1xf32>
    %52 = arith.mulf %50, %51 : vector<32x1xf32>
    %cst_27 = arith.constant 9.99999997E-7 : f32
    %53 = vector.broadcast %cst_27 : f32 to vector<32x1xf32>
    %54 = arith.addf %52, %53 : vector<32x1xf32>
    %55 = math.rsqrt %54 : vector<32x1xf32>
    %56 = vector.broadcast %55 : vector<32x1xf32> to vector<32x128xf32>
    %57 = arith.mulf %45, %56 : vector<32x128xf32>
    %58 = vector.broadcast %47 : vector<1x128xf32> to vector<32x128xf32>
    %59 = arith.mulf %57, %58 : vector<32x128xf32>
    %60 = arith.truncf %59 : vector<32x128xf32> to vector<32x128xbf16>
    %c0_28 = arith.constant 0 : index
    %c0_29 = arith.constant 0 : index
    %c0_30 = arith.constant 0 : index
    %61 = vector.load %arg8[%c0_28, %c0_29, %c0_30] : memref<1x128x256xbf16, #tpu.memory_space<vmem>>, vector<1x128x256xbf16>
    %62 = vector.shape_cast %61 : vector<1x128x256xbf16> to vector<128x256xbf16>
    %cst_31 = arith.constant dense<0.000000e+00> : vector<32x256xf32>
    %63 = tpu.matmul %60, %62, %cst_31 {dimension_numbers = #tpu.dot_dimension_numbers<[1], [0], [0], [1], [0, 0, 1, 1], [], []>} : vector<32x128xbf16>, vector<128x256xbf16>, vector<32x256xf32> -> vector<32x256xf32>
    %64 = vector.extract_strided_slice %63 {offsets = [0, 0], sizes = [32, 128], strides = [1, 1]} : vector<32x256xf32> to vector<32x128xf32>
    %65 = vector.extract_strided_slice %63 {offsets = [0, 128], sizes = [32, 128], strides = [1, 1]} : vector<32x256xf32> to vector<32x128xf32>
    %66 = arith.negf %64 : vector<32x128xf32>
    %67 = math.exp %66 : vector<32x128xf32>
    %cst_32 = arith.constant 1.000000e+00 : f32
    %68 = vector.broadcast %cst_32 : f32 to vector<32x128xf32>
    %69 = arith.addf %68, %67 : vector<32x128xf32>
    %70 = arith.divf %68, %69 : vector<32x128xf32>
    %71 = arith.mulf %64, %70 : vector<32x128xf32>
    %72 = arith.mulf %71, %65 : vector<32x128xf32>
    %73 = arith.truncf %72 : vector<32x128xf32> to vector<32x128xbf16>
    %c0_33 = arith.constant 0 : index
    %c0_34 = arith.constant 0 : index
    %c0_35 = arith.constant 0 : index
    %74 = vector.load %arg9[%c0_33, %c0_34, %c0_35] : memref<1x128x128xbf16, #tpu.memory_space<vmem>>, vector<1x128x128xbf16>
    %75 = vector.shape_cast %74 : vector<1x128x128xbf16> to vector<128x128xbf16>
    %cst_36 = arith.constant dense<0.000000e+00> : vector<32x128xf32>
    %76 = tpu.matmul %73, %75, %cst_36 {dimension_numbers = #tpu.dot_dimension_numbers<[1], [0], [0], [1], [0, 0, 1, 1], [], []>} : vector<32x128xbf16>, vector<128x128xbf16>, vector<32x128xf32> -> vector<32x128xf32>
    %77 = arith.addf %45, %76 : vector<32x128xf32>
    %c0_37 = arith.constant 0 : index
    %c0_38 = arith.constant 0 : index
    %78 = vector.load %arg21[%c0_37, %c0_38] : memref<32x128xf32, #tpu.memory_space<vmem>>, vector<32x128xf32>
    tpu.vector_store %arg21[%c0_37, %c0_38], %77 {strides = array<i32>} : memref<32x128xf32, #tpu.memory_space<vmem>>, vector<32x128xf32>,
    %c1_i32 = arith.constant 1 : i32
    %79 = arith.cmpi eq, %arg0, %c1_i32 : i32
    %80 = arith.extui %79 : i1 to i32
    %c0_i32_39 = arith.constant 0 : i32
    %81 = arith.cmpi ne, %80, %c0_i32_39 : i32
    scf.if %81 {
      %c0_40 = arith.constant 0 : index
      %c0_41 = arith.constant 0 : index
      %82 = vector.load %arg16[%c0_40, %c0_41] : memref<32x128xf32, #tpu.memory_space<vmem>>, vector<32x128xf32>
      tpu.vector_store %arg16[%c0_40, %c0_41], %77 {strides = array<i32>} : memref<32x128xf32, #tpu.memory_space<vmem>>, vector<32x128xf32>,
      %c0_42 = arith.constant 0 : index
      %c0_43 = arith.constant 0 : index
      %83 = vector.load %arg3[%c0_42, %c0_43] : memref<2x32xf32, #tpu.memory_space<vmem>>, vector<2x32xf32>
      %cst_44 = arith.constant dense<0.000000e+00> : vector<2x128xf32>
      %84 = tpu.matmul %83, %77, %cst_44 {dimension_numbers = #tpu.dot_dimension_numbers<[1], [0], [0], [1], [0, 0, 1, 1], [], []>} : vector<2x32xf32>, vector<32x128xf32>, vector<2x128xf32> -> vector<2x128xf32>
      %c0_45 = arith.constant 0 : index
      %c0_46 = arith.constant 0 : index
      %85 = vector.load %arg10[%c0_45, %c0_46] : memref<8x128xf32, #tpu.memory_space<vmem>>, vector<8x128xf32>
      %86 = arith.truncf %85 : vector<8x128xf32> to vector<8x128xbf16>
      %c0_47 = arith.constant 0 : index
      %c0_48 = arith.constant 0 : index
      %87 = vector.load %arg11[%c0_47, %c0_48] : memref<128x128xbf16, #tpu.memory_space<vmem>>, vector<128x128xbf16>
      %cst_49 = arith.constant dense<0.000000e+00> : vector<8x128xf32>
      %88 = tpu.matmul %86, %87, %cst_49 {dimension_numbers = #tpu.dot_dimension_numbers<[1], [0], [0], [1], [0, 0, 1, 1], [], []>} : vector<8x128xbf16>, vector<128x128xbf16>, vector<8x128xf32> -> vector<8x128xf32>
      %c0_50 = arith.constant 0 : index
      %c0_51 = arith.constant 0 : index
      %89 = vector.load %arg12[%c0_50, %c0_51] : memref<1x128xf32, #tpu.memory_space<vmem>>, vector<1x128xf32>
      %90 = vector.broadcast %89 : vector<1x128xf32> to vector<8x128xf32>
      %91 = arith.addf %88, %90 : vector<8x128xf32>
      %c0_52 = arith.constant 0 : index
      %c0_53 = arith.constant 0 : index
      %92 = vector.load %arg17[%c0_52, %c0_53] : memref<8x128xf32, #tpu.memory_space<vmem>>, vector<8x128xf32>
      tpu.vector_store %arg17[%c0_52, %c0_53], %91 {strides = array<i32>} : memref<8x128xf32, #tpu.memory_space<vmem>>, vector<8x128xf32>,
      %c0_54 = arith.constant 0 : index
      %c0_55 = arith.constant 0 : index
      %93 = vector.load %arg13[%c0_54, %c0_55] : memref<2x8xf32, #tpu.memory_space<vmem>>, vector<2x8xf32>
      %cst_56 = arith.constant dense<0.000000e+00> : vector<2x128xf32>
      %94 = tpu.matmul %93, %91, %cst_56 {dimension_numbers = #tpu.dot_dimension_numbers<[1], [0], [0], [1], [0, 0, 1, 1], [], []>} : vector<2x8xf32>, vector<8x128xf32>, vector<2x128xf32> -> vector<2x128xf32>
      %c0_57 = arith.constant 0 : index
      %c0_58 = arith.constant 0 : index
      %95 = vector.load %arg18[%c0_57, %c0_58] : memref<2x128xf32, #tpu.memory_space<vmem>>, vector<2x128xf32>
      tpu.vector_store %arg18[%c0_57, %c0_58], %94 {strides = array<i32>} : memref<2x128xf32, #tpu.memory_space<vmem>>, vector<2x128xf32>,
      %96 = arith.mulf %84, %84 : vector<2x128xf32>
      %cst_59 = arith.constant dense<0.000000e+00> : vector<2xf32>
      %97 = vector.multi_reduction <add>, %96, %cst_59 [1] : vector<2x128xf32> to vector<2xf32>
      %98 = vector.shape_cast %97 : vector<2xf32> to vector<2x1xf32>
      %cst_60 = arith.constant 9.99999997E-7 : f32
      %99 = vector.broadcast %cst_60 : f32 to vector<2x1xf32>
      %100 = arith.addf %98, %99 : vector<2x1xf32>
      %101 = math.rsqrt %100 : vector<2x1xf32>
      %102 = vector.broadcast %101 : vector<2x1xf32> to vector<2x128xf32>
      %103 = arith.mulf %84, %102 : vector<2x128xf32>
      %104 = arith.mulf %91, %91 : vector<8x128xf32>
      %cst_61 = arith.constant dense<0.000000e+00> : vector<8xf32>
      %105 = vector.multi_reduction <add>, %104, %cst_61 [1] : vector<8x128xf32> to vector<8xf32>
      %106 = vector.shape_cast %105 : vector<8xf32> to vector<8x1xf32>
      %cst_62 = arith.constant 9.99999997E-7 : f32
      %107 = vector.broadcast %cst_62 : f32 to vector<8x1xf32>
      %108 = arith.addf %106, %107 : vector<8x1xf32>
      %109 = math.rsqrt %108 : vector<8x1xf32>
      %110 = vector.broadcast %109 : vector<8x1xf32> to vector<8x128xf32>
      %111 = arith.mulf %91, %110 : vector<8x128xf32>
      %c0_63 = arith.constant 0 : index
      %c0_64 = arith.constant 0 : index
      %112 = vector.load %arg14[%c0_63, %c0_64] : memref<8x2xf32, #tpu.memory_space<vmem>>, vector<8x2xf32>
      %cst_65 = arith.constant dense<0.000000e+00> : vector<8x128xf32>
      %113 = tpu.matmul %112, %103, %cst_65 {dimension_numbers = #tpu.dot_dimension_numbers<[1], [0], [0], [1], [0, 0, 1, 1], [], []>} : vector<8x2xf32>, vector<2x128xf32>, vector<8x128xf32> -> vector<8x128xf32>
      %114 = arith.mulf %111, %113 : vector<8x128xf32>
      %cst_66 = arith.constant dense<0.000000e+00> : vector<8xf32>
      %115 = vector.multi_reduction <add>, %114, %cst_66 [1] : vector<8x128xf32> to vector<8xf32>
      %116 = vector.shape_cast %115 : vector<8xf32> to vector<8x1xf32>
      %c0_67 = arith.constant 0 : index
      %c0_68 = arith.constant 0 : index
      %117 = vector.load %arg19[%c0_67, %c0_68] : memref<8x1xf32, #tpu.memory_space<vmem>>, vector<8x1xf32>
      tpu.vector_store %arg19[%c0_67, %c0_68], %116 {strides = array<i32>} : memref<8x1xf32, #tpu.memory_space<vmem>>, vector<8x1xf32>,
      %c0_69 = arith.constant 0 : index
      %c0_70 = arith.constant 0 : index
      %118 = vector.load %arg15[%c0_69, %c0_70] : memref<8x1xf32, #tpu.memory_space<vmem>>, vector<8x1xf32>
      %119 = arith.subf %116, %118 : vector<8x1xf32>
      %120 = arith.mulf %119, %119 : vector<8x1xf32>
      %121 = vector.shape_cast %120 : vector<8x1xf32> to vector<1x8x1xf32>
      %cst_71 = arith.constant dense<0.000000e+00> : vector<1xf32>
      %122 = vector.multi_reduction <add>, %121, %cst_71 [1, 2] : vector<1x8x1xf32> to vector<1xf32>
      %123 = vector.shape_cast %122 : vector<1xf32> to vector<1x1x1xf32>
      %124 = vector.extract %123[0, 0, 0] : f32 from vector<1x1x1xf32>
      %cst_72 = arith.constant 8.000000e+00 : f32
      %125 = arith.divf %124, %cst_72 : f32
      %126 = vector.broadcast %125 : f32 to vector<1x1xf32>
      %c0_73 = arith.constant 0 : index
      %c0_74 = arith.constant 0 : index
      %127 = vector.load %arg20[%c0_73, %c0_74] : memref<1x1xf32, #tpu.memory_space<vmem>>, vector<1x1xf32>
      tpu.vector_store %arg20[%c0_73, %c0_74], %126 {strides = array<i32>} : memref<1x1xf32, #tpu.memory_space<vmem>>, vector<1x1xf32>,
    } else {
    }
    return
  }
  func.func @transform_0(%arg0: i32) -> (i32, i32) {
    %c0_i32 = arith.constant 0 : i32
    %c0_i32_0 = arith.constant 0 : i32
    %c0_i32_1 = arith.constant 0 : i32
    return %c0_i32, %c0_i32_0 : i32, i32
  }
  func.func @transform_1(%arg0: i32) -> (i32, i32) {
    %c0_i32 = arith.constant 0 : i32
    %c0_i32_0 = arith.constant 0 : i32
    %c0_i32_1 = arith.constant 0 : i32
    return %c0_i32, %c0_i32_0 : i32, i32
  }
  func.func @transform_2(%arg0: i32) -> (i32, i32) {
    %c0_i32 = arith.constant 0 : i32
    %c0_i32_0 = arith.constant 0 : i32
    %c0_i32_1 = arith.constant 0 : i32
    return %c0_i32, %c0_i32_0 : i32, i32
  }
  func.func @transform_3(%arg0: i32) -> (i32, i32, i32) {
    %c0_i32 = arith.constant 0 : i32
    %c0_i32_0 = arith.constant 0 : i32
    %c0_i32_1 = arith.constant 0 : i32
    return %arg0, %c0_i32, %c0_i32_0 : i32, i32, i32
  }
  func.func @transform_4(%arg0: i32) -> (i32, i32, i32) {
    %c0_i32 = arith.constant 0 : i32
    %c0_i32_0 = arith.constant 0 : i32
    %c0_i32_1 = arith.constant 0 : i32
    return %arg0, %c0_i32, %c0_i32_0 : i32, i32, i32
  }
  func.func @transform_5(%arg0: i32) -> (i32, i32, i32) {
    %c0_i32 = arith.constant 0 : i32
    %c0_i32_0 = arith.constant 0 : i32
    %c0_i32_1 = arith.constant 0 : i32
    return %arg0, %c0_i32, %c0_i32_0 : i32, i32, i32
  }
  func.func @transform_6(%arg0: i32) -> (i32, i32, i32) {
    %c0_i32 = arith.constant 0 : i32
    %c0_i32_0 = arith.constant 0 : i32
    %c0_i32_1 = arith.constant 0 : i32
    return %arg0, %c0_i32, %c0_i32_0 : i32, i32, i32
  }
  func.func @transform_7(%arg0: i32) -> (i32, i32, i32) {
    %c0_i32 = arith.constant 0 : i32
    %c0_i32_0 = arith.constant 0 : i32
    %c0_i32_1 = arith.constant 0 : i32
    return %arg0, %c0_i32, %c0_i32_0 : i32, i32, i32
  }
  func.func @transform_8(%arg0: i32) -> (i32, i32, i32) {
    %c0_i32 = arith.constant 0 : i32
    %c0_i32_0 = arith.constant 0 : i32
    %c0_i32_1 = arith.constant 0 : i32
    return %arg0, %c0_i32, %c0_i32_0 : i32, i32, i32
  }
  func.func @transform_9(%arg0: i32) -> (i32, i32) {
    %c0_i32 = arith.constant 0 : i32
    %c0_i32_0 = arith.constant 0 : i32
    %c0_i32_1 = arith.constant 0 : i32
    return %c0_i32, %c0_i32_0 : i32, i32
  }
  func.func @transform_10(%arg0: i32) -> (i32, i32) {
    %c0_i32 = arith.constant 0 : i32
    %c0_i32_0 = arith.constant 0 : i32
    %c0_i32_1 = arith.constant 0 : i32
    return %c0_i32, %c0_i32_0 : i32, i32
  }
  func.func @transform_11(%arg0: i32) -> (i32, i32) {
    %c0_i32 = arith.constant 0 : i32
    %c0_i32_0 = arith.constant 0 : i32
    %c0_i32_1 = arith.constant 0 : i32
    return %c0_i32, %c0_i32_0 : i32, i32
  }
  func.func @transform_12(%arg0: i32) -> (i32, i32) {
    %c0_i32 = arith.constant 0 : i32
    %c0_i32_0 = arith.constant 0 : i32
    %c0_i32_1 = arith.constant 0 : i32
    return %c0_i32, %c0_i32_0 : i32, i32
  }
  func.func @transform_13(%arg0: i32) -> (i32, i32) {
    %c0_i32 = arith.constant 0 : i32
    %c0_i32_0 = arith.constant 0 : i32
    %c0_i32_1 = arith.constant 0 : i32
    return %c0_i32, %c0_i32_0 : i32, i32
  }
  func.func @transform_14(%arg0: i32) -> (i32, i32) {
    %c0_i32 = arith.constant 0 : i32
    %c0_i32_0 = arith.constant 0 : i32
    %c0_i32_1 = arith.constant 0 : i32
    return %c0_i32, %c0_i32_0 : i32, i32
  }
  func.func @transform_15(%arg0: i32) -> (i32, i32) {
    %c0_i32 = arith.constant 0 : i32
    %c0_i32_0 = arith.constant 0 : i32
    %c0_i32_1 = arith.constant 0 : i32
    return %c0_i32, %c0_i32_0 : i32, i32
  }
  func.func @transform_16(%arg0: i32) -> (i32, i32) {
    %c0_i32 = arith.constant 0 : i32
    %c0_i32_0 = arith.constant 0 : i32
    %c0_i32_1 = arith.constant 0 : i32
    return %c0_i32, %c0_i32_0 : i32, i32
  }
  func.func @transform_17(%arg0: i32) -> (i32, i32) {
    %c0_i32 = arith.constant 0 : i32
    %c0_i32_0 = arith.constant 0 : i32
    %c0_i32_1 = arith.constant 0 : i32
    return %c0_i32, %c0_i32_0 : i32, i32
  }
  func.func @transform_18(%arg0: i32) -> (i32, i32) {
    %c0_i32 = arith.constant 0 : i32
    %c0_i32_0 = arith.constant 0 : i32
    %c0_i32_1 = arith.constant 0 : i32
    return %c0_i32, %c0_i32_0 : i32, i32
  }
  func.func @transform_19(%arg0: i32) -> (i32, i32) {
    %c0_i32 = arith.constant 0 : i32
    %c0_i32_0 = arith.constant 0 : i32
    %c0_i32_1 = arith.constant 0 : i32
    return %c0_i32, %c0_i32_0 : i32, i32
  }
}

</mosaic_0001>

<llo_original>
// kernel: mul.23.clone
$region0: #{mul.23.clone}
  #allocation0 [shape = 's32[1]{0}', space=sflag, size = 0x4, scoped, tag = 'scoped memory for mul.23.clone']
  %s0 = inlined_call_operand.vmem [shape: f32[2,2], index: 0, kind: input, shape index: {}]
  %s1 = inlined_call_operand.vmem [shape: f32[2,2,4], index: 1, kind: output, shape index: {}]
  // Predicated region
  $region2: #{mul.23.clone} parent=0 // pred_check
    _
  $region3: #{mul.23.clone} parent=0 // pred_check_branch
    %3 = sbr.rel (0) target = $region5
  $region4: #{mul.23.clone} parent=0 // pred_region
    _
  $region5: #{mul.23.clone} parent=0 // pred_fallthru
    _
  %v4 = vld [vmem:[%s0] ss:$0 sm:$0xff]
  %5 = vst [vmem:[%s1] sm:$0xf] %v4
  %s6 = scalar_lea.vmem %s0, 1
  %v7 = vld [vmem:[%s6] ss:$0 sm:$0xff]
  %s8 = scalar_lea.vmem %s1, 4
  %9 = vst [vmem:[%s8] sm:$0xf] %v7

// kernel: _forward.1
$region0: #{_forward.1}
  #allocation0 [shape = 'u32[]', space=smem, size = 0x4, offset = 0x4, fixed_abs, tag = 'smem constant byte address 0x4 - core index']
  #allocation1 [shape = 'u32[144,128]{1,0:T(1,128)}', space=vmem, size = 0x12000, scoped, tag = 'internal scratch']
  #allocation2 [shape = 'f32[32,128]{1,0:T(8,128)}', space=vmem, size = 0x4000, scoped, tag = 'scratch operand']
  %s0 = inlined_call_operand.vmem [shape: f32[32,128], index: 0, kind: input, shape index: {}]
  %s1 = inlined_call_operand.vmem [shape: f32[32,32], index: 1, kind: input, shape index: {}]
  %s2 = inlined_call_operand.vmem [shape: f32[2,32], index: 2, kind: input, shape index: {}]
  %s3 = inlined_call_operand.vmem [shape: f32[2,1,128], index: 3, kind: input, shape index: {}, may-alias: {3,6}]
  %s4 = inlined_call_operand.vmem [shape: bf16[2,128,384], index: 4, kind: input, shape index: {}]
  %s5 = inlined_call_operand.hbm [shape: bf16[2,128,128], index: 5, kind: input, shape index: {}]
  %s6 = inlined_call_operand.vmem [shape: f32[2,1,128], index: 6, kind: input, shape index: {}, may-alias: {3,6}]
  %s7 = inlined_call_operand.hbm [shape: bf16[2,128,256], index: 7, kind: input, shape index: {}]
  %s8 = inlined_call_operand.vmem [shape: bf16[2,128,128], index: 8, kind: input, shape index: {}]
  %s9 = inlined_call_operand.vmem [shape: f32[8,128], index: 9, kind: input, shape index: {}]
  %s10 = inlined_call_operand.vmem [shape: bf16[128,128], index: 10, kind: input, shape index: {}]
  %s11 = inlined_call_operand.vmem [shape: f32[1,128], index: 11, kind: input, shape index: {}]
  %s12 = inlined_call_operand.vmem [shape: f32[2,8], index: 12, kind: input, shape index: {}]
  %s13 = inlined_call_operand.vmem [shape: f32[8,2], index: 13, kind: input, shape index: {}]
  %s14 = inlined_call_operand.vmem [shape: f32[8,1], index: 14, kind: input, shape index: {}]
  %s15 = inlined_call_operand.vmem [shape: f32[32,128], index: 15, kind: output, shape index: {0}]
  %s16 = inlined_call_operand.hbm [shape: f32[8,128], index: 16, kind: output, shape index: {1}]
  %s17 = inlined_call_operand.hbm [shape: f32[2,128], index: 17, kind: output, shape index: {2}]
  %s18 = inlined_call_operand.vmem [shape: f32[8,1], index: 18, kind: output, shape index: {3}]
  %s19 = inlined_call_operand.hbm [shape: f32[1,1], index: 19, kind: output, shape index: {4}]
  %20 = xla_tuple %s15, %s16, %s17, %s18, %s19
  %s21 = sld [smem:[#allocation0]]
  $region141: #{_forward.1} parent=0
    _
  %s23 = ssub.s32 1, %s21
  %s24 = scalar_select 0, %s23, %s21
  $region1: #{_forward.1} parent=0
    #allocation3 [shape = 'u8[65536]{0}', space=vmem, size = 0x10000, scoped, tag = 'input window, operand 5']
    #allocation4 [shape = 's32[2]{0}', space=sflag, size = 0x8, scoped, tag = 'scoped memory for _forward.1']
    #allocation5 [shape = 's32[2]{0}', space=sflag, size = 0x8, scoped, tag = 'scoped memory for _forward.1']
    #allocation6 [shape = 'u8[131072]{0}', space=vmem, size = 0x20000, scoped, tag = 'input window, operand 7']
    #allocation7 [shape = 's32[2]{0}', space=sflag, size = 0x8, scoped, tag = 'scoped memory for _forward.1']
    #allocation8 [shape = 'u8[4096]{0}', space=vmem, size = 0x1000, scoped, tag = 'output window, operand 1, single buffered']
    #allocation9 [shape = 'u8[1024]{0}', space=vmem, size = 0x400, scoped, tag = 'output window, operand 2, single buffered']
    #allocation10 [shape = 's32[1]{0}', space=sflag, size = 0x4, scoped, tag = 'scoped memory for _forward.1']
    #allocation11 [shape = 'u8[512]{0}', space=vmem, size = 0x400, scoped, tag = 'output window, operand 4, single buffered']
    %25 = vsyncpa [#allocation4], 0
    %s26 = scalar_lea.sflag [#allocation4], 1
    %27 = vsyncpa %s26, 0
    %28 = vsyncpa [#allocation7], 0
    %s29 = scalar_lea.sflag [#allocation7], 1
    %30 = vsyncpa %s29, 0
    %31 = vsyncpa [#allocation5], 0
    %32 = vsyncpa [#allocation10], 0
    loop: start=0, step=1, limit=4
    $region2: #{_forward.1} parent=1 // loop_pre_header
      _
    $region3: #{_forward.1} parent=1 // loop_header
      %s34 = sphi 0, %s38
      %p35 = scmp.ge.s32.totalorder %s34, 4
      %s42 = sphi 0, %s42
      %s44 = sphi 0, %s42
      %s45 = sphi 0, %s44
      %s59 = sphi 0, %s45
      %s63 = sphi 0, %s63
      %s65 = sphi 0, %s63
      %s66 = sphi 0, %s65
      %s80 = sphi 0, %s66
      %s84 = sphi 0, %s84
      %s86 = sphi 0, %s84
      %s87 = sphi 0, %s86
      %s101 = sphi 0, %s87
      %s107 = sphi 0, %s109
      %s110 = sphi 0, %s107
      %s111 = sphi 0, %s110
      %s127 = sphi 0, %s111
      %s133 = sphi 0, %s135
      %s136 = sphi 0, %s133
      %s137 = sphi 0, %s136
      %s153 = sphi 0, %s137
      %s159 = sphi 0, %s161
      %s162 = sphi 0, %s159
      %s163 = sphi 0, %s162
      %s179 = sphi 0, %s163
      %s185 = sphi 0, %s187
      %s188 = sphi 0, %s185
      %s189 = sphi 0, %s188
      %s205 = sphi 0, %s189
      %s211 = sphi 0, %s213
      %s214 = sphi 0, %s211
      %s215 = sphi 0, %s214
      %s231 = sphi 0, %s215
      %s237 = sphi 0, %s239
      %s240 = sphi 0, %s237
      %s241 = sphi 0, %s240
      %s257 = sphi 0, %s241
      %s261 = sphi 0, %s261
      %s263 = sphi 0, %s261
      %s264 = sphi 0, %s263
      %s278 = sphi 0, %s264
      %s282 = sphi 0, %s282
      %s284 = sphi 0, %s282
      %s285 = sphi 0, %s284
      %s299 = sphi 0, %s285
      %s303 = sphi 0, %s303
      %s305 = sphi 0, %s303
      %s306 = sphi 0, %s305
      %s320 = sphi 0, %s306
      %s324 = sphi 0, %s324
      %s326 = sphi 0, %s324
      %s327 = sphi 0, %s326
      %s341 = sphi 0, %s327
      %s345 = sphi 0, %s345
      %s347 = sphi 0, %s345
      %s348 = sphi 0, %s347
      %s362 = sphi 0, %s348
      %s366 = sphi 0, %s366
      %s368 = sphi 0, %s366
      %s369 = sphi 0, %s368
      %s383 = sphi 0, %s369
      %s387 = sphi 0, %s387
      %s389 = sphi 0, %s387
      %s390 = sphi 0, %s389
      %s404 = sphi 0, %s390
      %s408 = sphi 0, %s408
      %s410 = sphi 0, %s408
      %s411 = sphi 0, %s410
      %s425 = sphi 0, %s411
      %s429 = sphi 0, %s429
      %s431 = sphi 0, %s429
      %s432 = sphi 0, %s431
      %s446 = sphi 0, %s432
      %s450 = sphi 0, %s450
      %s452 = sphi 0, %s450
      %s453 = sphi 0, %s452
      %s467 = sphi 0, %s453
      %s471 = sphi 0, %s471
      %s473 = sphi 0, %s471
      %s474 = sphi 0, %s473
      %s488 = sphi 0, %s474
    $region4: #{_forward.1} parent=1 // loop_header_branch
      %37 = sbr.rel (%p35) target = $region8
    $region5: #{_forward.1} parent=1 // loop_body
      %s39 = ssub.s32 %s34, 1
      %s40 = ssub.s32 %s34, 2
      %s41 = sadd.s32 %s34, 1
      %s43 = sadd.s32 %s42, 1
      %p46 = scmp.eq.s32.totalorder %s34, 1
      %p47 = scmp.ne.s32.totalorder %s42, %s44
      %p48 = scmp.eq.s32.totalorder %s34, 0
      %p49 = por %p47, %p48
      %p50 = scmp.ne.s32.totalorder %s42, %s44
      %p51 = scmp.eq.s32.totalorder %s39, 1
      %p52 = por %p50, %p51
      %p53 = scmp.ne.s32.totalorder %s44, %s45
      %p54 = scmp.eq.s32.totalorder %s39, 0
      %p55 = por %p53, %p54
      %p56 = scmp.ne.s32.totalorder %s44, %s45
      %p57 = scmp.eq.s32.totalorder %s40, 1
      %p58 = por %p56, %p57
      %p60 = scmp.ne.s32.totalorder %s45, %s59
      %p61 = scmp.eq.s32.totalorder %s40, 0
      %p62 = por %p60, %p61
      %s64 = sadd.s32 %s63, 1
      %p67 = scmp.eq.s32.totalorder %s34, 1
      %p68 = scmp.ne.s32.totalorder %s63, %s65
      %p69 = scmp.eq.s32.totalorder %s34, 0
      %p70 = por %p68, %p69
      %p71 = scmp.ne.s32.totalorder %s63, %s65
      %p72 = scmp.eq.s32.totalorder %s39, 1
      %p73 = por %p71, %p72
      %p74 = scmp.ne.s32.totalorder %s65, %s66
      %p75 = scmp.eq.s32.totalorder %s39, 0
      %p76 = por %p74, %p75
      %p77 = scmp.ne.s32.totalorder %s65, %s66
      %p78 = scmp.eq.s32.totalorder %s40, 1
      %p79 = por %p77, %p78
      %p81 = scmp.ne.s32.totalorder %s66, %s80
      %p82 = scmp.eq.s32.totalorder %s40, 0
      %p83 = por %p81, %p82
      %s85 = sadd.s32 %s84, 1
      %p88 = scmp.eq.s32.totalorder %s34, 1
      %p89 = scmp.ne.s32.totalorder %s84, %s86
      %p90 = scmp.eq.s32.totalorder %s34, 0
      %p91 = por %p89, %p90
      %p92 = scmp.ne.s32.totalorder %s84, %s86
      %p93 = scmp.eq.s32.totalorder %s39, 1
      %p94 = por %p92, %p93
      %p95 = scmp.ne.s32.totalorder %s86, %s87
      %p96 = scmp.eq.s32.totalorder %s39, 0
      %p97 = por %p95, %p96
      %p98 = scmp.ne.s32.totalorder %s86, %s87
      %p99 = scmp.eq.s32.totalorder %s40, 1
      %p100 = por %p98, %p99
      %p102 = scmp.ne.s32.totalorder %s87, %s101
      %p103 = scmp.eq.s32.totalorder %s40, 0
      %p104 = por %p102, %p103
      %s105 = ssub.s32 %s34, %s41
      %p106 = scmp.eq.s32.totalorder %s105, 0
      %s108 = sadd.s32 %s107, 1
      %s109 = scalar_select %p106, %s107, %s108
      %p112 = pneg %p106
      %p113 = scmp.eq.s32.totalorder %s34, 1
      %p114 = por %p112, %p113
      %p115 = scmp.ne.s32.totalorder %s107, %s110
      %p116 = scmp.eq.s32.totalorder %s34, 0
      %p117 = por %p115, %p116
      %p118 = scmp.ne.s32.totalorder %s107, %s110
      %p119 = scmp.eq.s32.totalorder %s39, 1
      %p120 = por %p118, %p119
      %p121 = scmp.ne.s32.totalorder %s110, %s111
      %p122 = scmp.eq.s32.totalorder %s39, 0
      %p123 = por %p121, %p122
      %p124 = scmp.ne.s32.totalorder %s110, %s111
      %p125 = scmp.eq.s32.totalorder %s40, 1
      %p126 = por %p124, %p125
      %p128 = scmp.ne.s32.totalorder %s111, %s127
      %p129 = scmp.eq.s32.totalorder %s40, 0
      %p130 = por %p128, %p129
      %s131 = ssub.s32 %s34, %s41
      %p132 = scmp.eq.s32.totalorder %s131, 0
      %s134 = sadd.s32 %s133, 1
      %s135 = scalar_select %p132, %s133, %s134
      %p138 = pneg %p132
      %p139 = scmp.eq.s32.totalorder %s34, 1
      %p140 = por %p138, %p139
      %p141 = scmp.ne.s32.totalorder %s133, %s136
      %p142 = scmp.eq.s32.totalorder %s34, 0
      %p143 = por %p141, %p142
      %p144 = scmp.ne.s32.totalorder %s133, %s136
      %p145 = scmp.eq.s32.totalorder %s39, 1
      %p146 = por %p144, %p145
      %p147 = scmp.ne.s32.totalorder %s136, %s137
      %p148 = scmp.eq.s32.totalorder %s39, 0
      %p149 = por %p147, %p148
      %p150 = scmp.ne.s32.totalorder %s136, %s137
      %p151 = scmp.eq.s32.totalorder %s40, 1
      %p152 = por %p150, %p151
      %p154 = scmp.ne.s32.totalorder %s137, %s153
      %p155 = scmp.eq.s32.totalorder %s40, 0
      %p156 = por %p154, %p155
      %s157 = ssub.s32 %s34, %s41
      %p158 = scmp.eq.s32.totalorder %s157, 0
      %s160 = sadd.s32 %s159, 1
      %s161 = scalar_select %p158, %s159, %s160
      %p164 = pneg %p158
      %p165 = scmp.eq.s32.totalorder %s34, 1
      %p166 = por %p164, %p165
      %p167 = scmp.ne.s32.totalorder %s159, %s162
      %p168 = scmp.eq.s32.totalorder %s34, 0
      %p169 = por %p167, %p168
      %p170 = scmp.ne.s32.totalorder %s159, %s162
      %p171 = scmp.eq.s32.totalorder %s39, 1
      %p172 = por %p170, %p171
      %p173 = scmp.ne.s32.totalorder %s162, %s163
      %p174 = scmp.eq.s32.totalorder %s39, 0
      %p175 = por %p173, %p174
      %p176 = scmp.ne.s32.totalorder %s162, %s163
      %p177 = scmp.eq.s32.totalorder %s40, 1
      %p178 = por %p176, %p177
      %p180 = scmp.ne.s32.totalorder %s163, %s179
      %p181 = scmp.eq.s32.totalorder %s40, 0
      %p182 = por %p180, %p181
      %s183 = ssub.s32 %s34, %s41
      %p184 = scmp.eq.s32.totalorder %s183, 0
      %s186 = sadd.s32 %s185, 1
      %s187 = scalar_select %p184, %s185, %s186
      %p190 = pneg %p184
      %p191 = scmp.eq.s32.totalorder %s34, 1
      %p192 = por %p190, %p191
      %p193 = scmp.ne.s32.totalorder %s185, %s188
      %p194 = scmp.eq.s32.totalorder %s34, 0
      %p195 = por %p193, %p194
      %p196 = scmp.ne.s32.totalorder %s185, %s188
      %p197 = scmp.eq.s32.totalorder %s39, 1
      %p198 = por %p196, %p197
      %p199 = scmp.ne.s32.totalorder %s188, %s189
      %p200 = scmp.eq.s32.totalorder %s39, 0
      %p201 = por %p199, %p200
      %p202 = scmp.ne.s32.totalorder %s188, %s189
      %p203 = scmp.eq.s32.totalorder %s40, 1
      %p204 = por %p202, %p203
      %p206 = scmp.ne.s32.totalorder %s189, %s205
      %p207 = scmp.eq.s32.totalorder %s40, 0
      %p208 = por %p206, %p207
      %s209 = ssub.s32 %s34, %s41
      %p210 = scmp.eq.s32.totalorder %s209, 0
      %s212 = sadd.s32 %s211, 1
      %s213 = scalar_select %p210, %s211, %s212
      %p216 = pneg %p210
      %p217 = scmp.eq.s32.totalorder %s34, 1
      %p218 = por %p216, %p217
      %p219 = scmp.ne.s32.totalorder %s211, %s214
      %p220 = scmp.eq.s32.totalorder %s34, 0
      %p221 = por %p219, %p220
      %p222 = scmp.ne.s32.totalorder %s211, %s214
      %p223 = scmp.eq.s32.totalorder %s39, 1
      %p224 = por %p222, %p223
      %p225 = scmp.ne.s32.totalorder %s214, %s215
      %p226 = scmp.eq.s32.totalorder %s39, 0
      %p227 = por %p225, %p226
      %p228 = scmp.ne.s32.totalorder %s214, %s215
      %p229 = scmp.eq.s32.totalorder %s40, 1
      %p230 = por %p228, %p229
      %p232 = scmp.ne.s32.totalorder %s215, %s231
      %p233 = scmp.eq.s32.totalorder %s40, 0
      %p234 = por %p232, %p233
      %s235 = ssub.s32 %s34, %s41
      %p236 = scmp.eq.s32.totalorder %s235, 0
      %s238 = sadd.s32 %s237, 1
      %s239 = scalar_select %p236, %s237, %s238
      %p242 = pneg %p236
      %p243 = scmp.eq.s32.totalorder %s34, 1
      %p244 = por %p242, %p243
      %p245 = scmp.ne.s32.totalorder %s237, %s240
      %p246 = scmp.eq.s32.totalorder %s34, 0
      %p247 = por %p245, %p246
      %p248 = scmp.ne.s32.totalorder %s237, %s240
      %p249 = scmp.eq.s32.totalorder %s39, 1
      %p250 = por %p248, %p249
      %p251 = scmp.ne.s32.totalorder %s240, %s241
      %p252 = scmp.eq.s32.totalorder %s39, 0
      %p253 = por %p251, %p252
      %p254 = scmp.ne.s32.totalorder %s240, %s241
      %p255 = scmp.eq.s32.totalorder %s40, 1
      %p256 = por %p254, %p255
      %p258 = scmp.ne.s32.totalorder %s241, %s257
      %p259 = scmp.eq.s32.totalorder %s40, 0
      %p260 = por %p258, %p259
      %s262 = sadd.s32 %s261, 1
      %p265 = scmp.eq.s32.totalorder %s34, 1
      %p266 = scmp.ne.s32.totalorder %s261, %s263
      %p267 = scmp.eq.s32.totalorder %s34, 0
      %p268 = por %p266, %p267
      %p269 = scmp.ne.s32.totalorder %s261, %s263
      %p270 = scmp.eq.s32.totalorder %s39, 1
      %p271 = por %p269, %p270
      %p272 = scmp.ne.s32.totalorder %s263, %s264
      %p273 = scmp.eq.s32.totalorder %s39, 0
      %p274 = por %p272, %p273
      %p275 = scmp.ne.s32.totalorder %s263, %s264
      %p276 = scmp.eq.s32.totalorder %s40, 1
      %p277 = por %p275, %p276
      %p279 = scmp.ne.s32.totalorder %s264, %s278
      %p280 = scmp.eq.s32.totalorder %s40, 0
      %p281 = por %p279, %p280
      %s283 = sadd.s32 %s282, 1
      %p286 = scmp.eq.s32.totalorder %s34, 1
      %p287 = scmp.ne.s32.totalorder %s282, %s284
      %p288 = scmp.eq.s32.totalorder %s34, 0
      %p289 = por %p287, %p288
      %p290 = scmp.ne.s32.totalorder %s282, %s284
      %p291 = scmp.eq.s32.totalorder %s39, 1
      %p292 = por %p290, %p291
      %p293 = scmp.ne.s32.totalorder %s284, %s285
      %p294 = scmp.eq.s32.totalorder %s39, 0
      %p295 = por %p293, %p294
      %p296 = scmp.ne.s32.totalorder %s284, %s285
      %p297 = scmp.eq.s32.totalorder %s40, 1
      %p298 = por %p296, %p297
      %p300 = scmp.ne.s32.totalorder %s285, %s299
      %p301 = scmp.eq.s32.totalorder %s40, 0
      %p302 = por %p300, %p301
      %s304 = sadd.s32 %s303, 1
      %p307 = scmp.eq.s32.totalorder %s34, 1
      %p308 = scmp.ne.s32.totalorder %s303, %s305
      %p309 = scmp.eq.s32.totalorder %s34, 0
      %p310 = por %p308, %p309
      %p311 = scmp.ne.s32.totalorder %s303, %s305
      %p312 = scmp.eq.s32.totalorder %s39, 1
      %p313 = por %p311, %p312
      %p314 = scmp.ne.s32.totalorder %s305, %s306
      %p315 = scmp.eq.s32.totalorder %s39, 0
      %p316 = por %p314, %p315
      %p317 = scmp.ne.s32.totalorder %s305, %s306
      %p318 = scmp.eq.s32.totalorder %s40, 1
      %p319 = por %p317, %p318
      %p321 = scmp.ne.s32.totalorder %s306, %s320
      %p322 = scmp.eq.s32.totalorder %s40, 0
      %p323 = por %p321, %p322
      %s325 = sadd.s32 %s324, 1
      %p328 = scmp.eq.s32.totalorder %s34, 1
      %p329 = scmp.ne.s32.totalorder %s324, %s326
      %p330 = scmp.eq.s32.totalorder %s34, 0
      %p331 = por %p329, %p330
      %p332 = scmp.ne.s32.totalorder %s324, %s326
      %p333 = scmp.eq.s32.totalorder %s39, 1
      %p334 = por %p332, %p333
      %p335 = scmp.ne.s32.totalorder %s326, %s327
      %p336 = scmp.eq.s32.totalorder %s39, 0
      %p337 = por %p335, %p336
      %p338 = scmp.ne.s32.totalorder %s326, %s327
      %p339 = scmp.eq.s32.totalorder %s40, 1
      %p340 = por %p338, %p339
      %p342 = scmp.ne.s32.totalorder %s327, %s341
      %p343 = scmp.eq.s32.totalorder %s40, 0
      %p344 = por %p342, %p343
      %s346 = sadd.s32 %s345, 1
      %p349 = scmp.eq.s32.totalorder %s34, 1
      %p350 = scmp.ne.s32.totalorder %s345, %s347
      %p351 = scmp.eq.s32.totalorder %s34, 0
      %p352 = por %p350, %p351
      %p353 = scmp.ne.s32.totalorder %s345, %s347
      %p354 = scmp.eq.s32.totalorder %s39, 1
      %p355 = por %p353, %p354
      %p356 = scmp.ne.s32.totalorder %s347, %s348
      %p357 = scmp.eq.s32.totalorder %s39, 0
      %p358 = por %p356, %p357
      %p359 = scmp.ne.s32.totalorder %s347, %s348
      %p360 = scmp.eq.s32.totalorder %s40, 1
      %p361 = por %p359, %p360
      %p363 = scmp.ne.s32.totalorder %s348, %s362
      %p364 = scmp.eq.s32.totalorder %s40, 0
      %p365 = por %p363, %p364
      %s367 = sadd.s32 %s366, 1
      %p370 = scmp.eq.s32.totalorder %s34, 1
      %p371 = scmp.ne.s32.totalorder %s366, %s368
      %p372 = scmp.eq.s32.totalorder %s34, 0
      %p373 = por %p371, %p372
      %p374 = scmp.ne.s32.totalorder %s366, %s368
      %p375 = scmp.eq.s32.totalorder %s39, 1
      %p376 = por %p374, %p375
      %p377 = scmp.ne.s32.totalorder %s368, %s369
      %p378 = scmp.eq.s32.totalorder %s39, 0
      %p379 = por %p377, %p378
      %p380 = scmp.ne.s32.totalorder %s368, %s369
      %p381 = scmp.eq.s32.totalorder %s40, 1
      %p382 = por %p380, %p381
      %p384 = scmp.ne.s32.totalorder %s369, %s383
      %p385 = scmp.eq.s32.totalorder %s40, 0
      %p386 = por %p384, %p385
      %s388 = sadd.s32 %s387, 1
      %p391 = scmp.eq.s32.totalorder %s34, 1
      %p392 = scmp.ne.s32.totalorder %s387, %s389
      %p393 = scmp.eq.s32.totalorder %s34, 0
      %p394 = por %p392, %p393
      %p395 = scmp.ne.s32.totalorder %s387, %s389
      %p396 = scmp.eq.s32.totalorder %s39, 1
      %p397 = por %p395, %p396
      %p398 = scmp.ne.s32.totalorder %s389, %s390
      %p399 = scmp.eq.s32.totalorder %s39, 0
      %p400 = por %p398, %p399
      %p401 = scmp.ne.s32.totalorder %s389, %s390
      %p402 = scmp.eq.s32.totalorder %s40, 1
      %p403 = por %p401, %p402
      %p405 = scmp.ne.s32.totalorder %s390, %s404
      %p406 = scmp.eq.s32.totalorder %s40, 0
      %p407 = por %p405, %p406
      %s409 = sadd.s32 %s408, 1
      %p412 = scmp.eq.s32.totalorder %s34, 1
      %p413 = scmp.ne.s32.totalorder %s408, %s410
      %p414 = scmp.eq.s32.totalorder %s34, 0
      %p415 = por %p413, %p414
      %p416 = scmp.ne.s32.totalorder %s408, %s410
      %p417 = scmp.eq.s32.totalorder %s39, 1
      %p418 = por %p416, %p417
      %p419 = scmp.ne.s32.totalorder %s410, %s411
      %p420 = scmp.eq.s32.totalorder %s39, 0
      %p421 = por %p419, %p420
      %p422 = scmp.ne.s32.totalorder %s410, %s411
      %p423 = scmp.eq.s32.totalorder %s40, 1
      %p424 = por %p422, %p423
      %p426 = scmp.ne.s32.totalorder %s411, %s425
      %p427 = scmp.eq.s32.totalorder %s40, 0
      %p428 = por %p426, %p427
      %s430 = sadd.s32 %s429, 1
      %p433 = scmp.eq.s32.totalorder %s34, 1
      %p434 = scmp.ne.s32.totalorder %s429, %s431
      %p435 = scmp.eq.s32.totalorder %s34, 0
      %p436 = por %p434, %p435
      %p437 = scmp.ne.s32.totalorder %s429, %s431
      %p438 = scmp.eq.s32.totalorder %s39, 1
      %p439 = por %p437, %p438
      %p440 = scmp.ne.s32.totalorder %s431, %s432
      %p441 = scmp.eq.s32.totalorder %s39, 0
      %p442 = por %p440, %p441
      %p443 = scmp.ne.s32.totalorder %s431, %s432
      %p444 = scmp.eq.s32.totalorder %s40, 1
      %p445 = por %p443, %p444
      %p447 = scmp.ne.s32.totalorder %s432, %s446
      %p448 = scmp.eq.s32.totalorder %s40, 0
      %p449 = por %p447, %p448
      %s451 = sadd.s32 %s450, 1
      %p454 = scmp.eq.s32.totalorder %s34, 1
      %p455 = scmp.ne.s32.totalorder %s450, %s452
      %p456 = scmp.eq.s32.totalorder %s34, 0
      %p457 = por %p455, %p456
      %p458 = scmp.ne.s32.totalorder %s450, %s452
      %p459 = scmp.eq.s32.totalorder %s39, 1
      %p460 = por %p458, %p459
      %p461 = scmp.ne.s32.totalorder %s452, %s453
      %p462 = scmp.eq.s32.totalorder %s39, 0
      %p463 = por %p461, %p462
      %p464 = scmp.ne.s32.totalorder %s452, %s453
      %p465 = scmp.eq.s32.totalorder %s40, 1
      %p466 = por %p464, %p465
      %p468 = scmp.ne.s32.totalorder %s453, %s467
      %p469 = scmp.eq.s32.totalorder %s40, 0
      %p470 = por %p468, %p469
      %s472 = sadd.s32 %s471, 1
      %p475 = scmp.eq.s32.totalorder %s34, 1
      %p476 = scmp.ne.s32.totalorder %s471, %s473
      %p477 = scmp.eq.s32.totalorder %s34, 0
      %p478 = por %p476, %p477
      %p479 = scmp.ne.s32.totalorder %s471, %s473
      %p480 = scmp.eq.s32.totalorder %s39, 1
      %p481 = por %p479, %p480
      %p482 = scmp.ne.s32.totalorder %s473, %s474
      %p483 = scmp.eq.s32.totalorder %s39, 0
      %p484 = por %p482, %p483
      %p485 = scmp.ne.s32.totalorder %s473, %s474
      %p486 = scmp.eq.s32.totalorder %s40, 1
      %p487 = por %p485, %p486
      %p489 = scmp.ne.s32.totalorder %s474, %s488
      %p490 = scmp.eq.s32.totalorder %s40, 0
      %p491 = por %p489, %p490
      %p492 = scmp.le.s32.totalorder 1, %s34
      %p493 = scmp.lt.s32.totalorder %s34, 3
      %p494 = pnand %p492, %p493
      %p495 = pneg %p494
      // Predicated region
      $region9: #{_forward.1} parent=5 // pred_check
        _
      $region10: #{_forward.1} parent=5 // pred_check_branch
        %497 = sbr.rel (%p494) target = $region12
      $region11: #{_forward.1} parent=5 // pred_region
        %s498 = ssub.s32 %s34, 1
        // Predicated region
        $region13: #{_forward.1} parent=11 // pred_check
          %p499 = pneg %p55
        $region14: #{_forward.1} parent=11 // pred_check_branch
          %501 = sbr.rel (%p499) target = $region16
        $region15: #{_forward.1} parent=11 // pred_region
          _
        $region16: #{_forward.1} parent=11 // pred_fallthru
          _
        // Predicated region
        $region17: #{_forward.1} parent=11 // pred_check
          %p502 = pneg %p76
        $region18: #{_forward.1} parent=11 // pred_check_branch
          %504 = sbr.rel (%p502) target = $region20
        $region19: #{_forward.1} parent=11 // pred_region
          _
        $region20: #{_forward.1} parent=11 // pred_fallthru
          _
        // Predicated region
        $region21: #{_forward.1} parent=11 // pred_check
          %p505 = pneg %p97
        $region22: #{_forward.1} parent=11 // pred_check_branch
          %507 = sbr.rel (%p505) target = $region24
        $region23: #{_forward.1} parent=11 // pred_region
          _
        $region24: #{_forward.1} parent=11 // pred_fallthru
          _
        // Predicated region
        $region25: #{_forward.1} parent=11 // pred_check
          %p508 = pneg %p274
        $region26: #{_forward.1} parent=11 // pred_check_branch
          %510 = sbr.rel (%p508) target = $region28
        $region27: #{_forward.1} parent=11 // pred_region
          _
        $region28: #{_forward.1} parent=11 // pred_fallthru
          _
        // Predicated region
        $region29: #{_forward.1} parent=11 // pred_check
          %p511 = pneg %p295
        $region30: #{_forward.1} parent=11 // pred_check_branch
          %513 = sbr.rel (%p511) target = $region32
        $region31: #{_forward.1} parent=11 // pred_region
          _
        $region32: #{_forward.1} parent=11 // pred_fallthru
          _
        // Predicated region
        $region33: #{_forward.1} parent=11 // pred_check
          %p514 = pneg %p316
        $region34: #{_forward.1} parent=11 // pred_check_branch
          %516 = sbr.rel (%p514) target = $region36
        $region35: #{_forward.1} parent=11 // pred_region
          _
        $region36: #{_forward.1} parent=11 // pred_fallthru
          _
        // Predicated region
        $region37: #{_forward.1} parent=11 // pred_check
          %p517 = pneg %p337
        $region38: #{_forward.1} parent=11 // pred_check_branch
          %519 = sbr.rel (%p517) target = $region40
        $region39: #{_forward.1} parent=11 // pred_region
          _
        $region40: #{_forward.1} parent=11 // pred_fallthru
          _
        // Predicated region
        $region41: #{_forward.1} parent=11 // pred_check
          %p520 = pneg %p358
        $region42: #{_forward.1} parent=11 // pred_check_branch
          %522 = sbr.rel (%p520) target = $region44
        $region43: #{_forward.1} parent=11 // pred_region
          _
        $region44: #{_forward.1} parent=11 // pred_fallthru
          _
        // Predicated region
        $region45: #{_forward.1} parent=11 // pred_check
          %p523 = pneg %p379
        $region46: #{_forward.1} parent=11 // pred_check_branch
          %525 = sbr.rel (%p523) target = $region48
        $region47: #{_forward.1} parent=11 // pred_region
          _
        $region48: #{_forward.1} parent=11 // pred_fallthru
          _
      $region12: #{_forward.1} parent=5 // pred_fallthru
        _
      %p526 = scmp.lt.s32.totalorder %s34, 2
      // Predicated region
      $region49: #{_forward.1} parent=5 // pred_check
        %p527 = pneg %p526
      $region50: #{_forward.1} parent=5 // pred_check_branch
        %529 = sbr.rel (%p527) target = $region52
      $region51: #{_forward.1} parent=5 // pred_region
        // Predicated region
        $region53: #{_forward.1} parent=51 // pred_check
          %p530 = pneg %p117
        $region54: #{_forward.1} parent=51 // pred_check_branch
          %532 = sbr.rel (%p530) target = $region56
        $region55: #{_forward.1} parent=51 // pred_region
          %p533 = scmp.lt.s32.totalorder %s34, 1
          %s534 = scalar_select %p533, %s34, 1
          %s535 = scalar_lea.vmem %s3, %s534
        $region56: #{_forward.1} parent=51 // pred_fallthru
          _
        // Predicated region
        $region57: #{_forward.1} parent=51 // pred_check
          %p536 = pneg %p143
        $region58: #{_forward.1} parent=51 // pred_check_branch
          %538 = sbr.rel (%p536) target = $region60
        $region59: #{_forward.1} parent=51 // pred_region
          %p539 = scmp.lt.s32.totalorder %s34, 1
          %s540 = scalar_select %p539, %s34, 1
          %s541 = smul.addr %s540, 48
          %s542 = smul.addr %s541, 4
          %s543 = scalar_lea.vmem %s4, %s542
        $region60: #{_forward.1} parent=51 // pred_fallthru
          _
        // Predicated region
        $region61: #{_forward.1} parent=51 // pred_check
          %p544 = pneg %p169
        $region62: #{_forward.1} parent=51 // pred_check_branch
          %546 = sbr.rel (%p544) target = $region64
        $region63: #{_forward.1} parent=51 // pred_region
          %s547 = sand.u32 %s159, 1
          %s548 = scalar_lea.sflag [#allocation4], %s547
          %s549 = sand.u32 %s159, 1
          %s550 = smul.addr %s549, 64
          %s551 = scalar_lea.vmem [#allocation3], %s550
          %s553 = ssub.s32 1024, 1024
          %554 = vsyncadd %s548, %s553
          %s555 = smul.addr %s34, 16
          %s556 = smul.addr %s555, 64
          %s557 = scalar_lea.hbm %s5, %s556
          %s558 = sshll.u32 %s551, 4
          %s559 = int_to_ptr.vmem [resolvable:$true] %s558
          %564 = dma.hbm_to_vmem [thread:$0]  %s557, 1024, %s559, %s548, 64, 64, 4
        $region64: #{_forward.1} parent=51 // pred_fallthru
          _
        // Predicated region
        $region65: #{_forward.1} parent=51 // pred_check
          %p565 = pneg %p195
        $region66: #{_forward.1} parent=51 // pred_check_branch
          %567 = sbr.rel (%p565) target = $region68
        $region67: #{_forward.1} parent=51 // pred_region
          %p568 = scmp.lt.s32.totalorder %s34, 1
          %s569 = scalar_select %p568, %s34, 1
          %s570 = scalar_lea.vmem %s6, %s569
        $region68: #{_forward.1} parent=51 // pred_fallthru
          _
        // Predicated region
        $region69: #{_forward.1} parent=51 // pred_check
          %p571 = pneg %p221
        $region70: #{_forward.1} parent=51 // pred_check_branch
          %573 = sbr.rel (%p571) target = $region72
        $region71: #{_forward.1} parent=51 // pred_region
          %s574 = sand.u32 %s211, 1
          %s575 = scalar_lea.sflag [#allocation7], %s574
          %s576 = sand.u32 %s211, 1
          %s577 = smul.addr %s576, 128
          %s578 = scalar_lea.vmem [#allocation6], %s577
          %s580 = ssub.s32 2048, 2048
          %581 = vsyncadd %s575, %s580
          %s582 = smul.addr %s34, 32
          %s583 = smul.addr %s582, 64
          %s584 = scalar_lea.hbm %s7, %s583
          %s585 = sshll.u32 %s578, 4
          %s586 = int_to_ptr.vmem [resolvable:$true] %s585
          %591 = dma.hbm_to_vmem [thread:$0]  %s584, 2048, %s586, %s575, 128, 128, 8
        $region72: #{_forward.1} parent=51 // pred_fallthru
          _
        // Predicated region
        $region73: #{_forward.1} parent=51 // pred_check
          %p592 = pneg %p247
        $region74: #{_forward.1} parent=51 // pred_check_branch
          %594 = sbr.rel (%p592) target = $region76
        $region75: #{_forward.1} parent=51 // pred_region
          %p595 = scmp.lt.s32.totalorder %s34, 1
          %s596 = scalar_select %p595, %s34, 1
          %s597 = smul.addr %s596, 16
          %s598 = smul.addr %s597, 4
          %s599 = scalar_lea.vmem %s8, %s598
        $region76: #{_forward.1} parent=51 // pred_fallthru
          _
      $region52: #{_forward.1} parent=5 // pred_fallthru
        _
      %p600 = scmp.le.s32.totalorder 1, %s34
      %p601 = scmp.lt.s32.totalorder %s34, 3
      %p602 = pnand %p600, %p601
      %p603 = pneg %p602
      // Predicated region
      $region77: #{_forward.1} parent=5 // pred_check
        _
      $region78: #{_forward.1} parent=5 // pred_check_branch
        %605 = sbr.rel (%p602) target = $region80
      $region79: #{_forward.1} parent=5 // pred_region
        %s606 = ssub.s32 %s34, 1
        %s607 = sand.u32 %s162, 1
        %s608 = scalar_lea.sflag [#allocation4], %s607
        %s609 = sand.u32 %s162, 1
        %s610 = smul.addr %s609, 64
        %s611 = scalar_lea.vmem [#allocation3], %s610
        // Predicated region
        $region81: #{_forward.1} parent=79 // pred_check
          %p612 = pneg %p175
        $region82: #{_forward.1} parent=79 // pred_check_branch
          %614 = sbr.rel (%p612) target = $region84
        $region83: #{_forward.1} parent=79 // pred_region
          %615 = dma.done %s608, 1024
        $region84: #{_forward.1} parent=79 // pred_fallthru
          _
        %s616 = sand.u32 %s214, 1
        %s617 = scalar_lea.sflag [#allocation7], %s616
        %s618 = sand.u32 %s214, 1
        %s619 = smul.addr %s618, 128
        %s620 = scalar_lea.vmem [#allocation6], %s619
        // Predicated region
        $region85: #{_forward.1} parent=79 // pred_check
          %p621 = pneg %p227
        $region86: #{_forward.1} parent=79 // pred_check_branch
          %623 = sbr.rel (%p621) target = $region88
        $region87: #{_forward.1} parent=79 // pred_region
          %624 = dma.done %s617, 2048
        $region88: #{_forward.1} parent=79 // pred_fallthru
          _
        %p625 = pneg %p55
        %p626 = pneg %p52
        %p627 = pneg %p76
        %p628 = pneg %p73
        %p629 = pneg %p97
        %p630 = pneg %p94
        %p631 = scmp.lt.s32.totalorder %s39, 1
        %s632 = scalar_select %p631, %s39, 1
        %s633 = scalar_lea.vmem %s3, %s632
        %p634 = pneg %p123
        %p635 = pneg %p120
        %p636 = scmp.lt.s32.totalorder %s39, 1
        %s637 = scalar_select %p636, %s39, 1
        %s638 = smul.addr %s637, 48
        %s639 = smul.addr %s638, 4
        %s640 = scalar_lea.vmem %s4, %s639
        %p641 = pneg %p149
        %p642 = pneg %p146
        %s643 = sand.u32 %s162, 1
        %s644 = scalar_lea.sflag [#allocation4], %s643
        %s645 = sand.u32 %s162, 1
        %s646 = smul.addr %s645, 64
        %s647 = scalar_lea.vmem [#allocation3], %s646
        %p648 = pneg %p175
        %p649 = pneg %p172
        %p650 = scmp.lt.s32.totalorder %s39, 1
        %s651 = scalar_select %p650, %s39, 1
        %s652 = scalar_lea.vmem %s6, %s651
        %p653 = pneg %p201
        %p654 = pneg %p198
        %s655 = sand.u32 %s214, 1
        %s656 = scalar_lea.sflag [#allocation7], %s655
        %s657 = sand.u32 %s214, 1
        %s658 = smul.addr %s657, 128
        %s659 = scalar_lea.vmem [#allocation6], %s658
        %p660 = pneg %p227
        %p661 = pneg %p224
        %p662 = scmp.lt.s32.totalorder %s39, 1
        %s663 = scalar_select %p662, %s39, 1
        %s664 = smul.addr %s663, 16
        %s665 = smul.addr %s664, 4
        %s666 = scalar_lea.vmem %s8, %s665
        %p667 = pneg %p253
        %p668 = pneg %p250
        %p669 = pneg %p274
        %p670 = pneg %p271
        %p671 = pneg %p295
        %p672 = pneg %p292
        %p673 = pneg %p316
        %p674 = pneg %p313
        %p675 = pneg %p337
        %p676 = pneg %p334
        %p677 = pneg %p358
        %p678 = pneg %p355
        %p679 = pneg %p379
        %p680 = pneg %p376
        %p681 = pneg %p400
        %p682 = pneg %p397
        %p683 = pneg %p421
        %p684 = pneg %p418
        %p685 = pneg %p442
        %p686 = pneg %p439
        %p687 = pneg %p463
        %p688 = pneg %p460
        %p689 = pneg %p484
        %p690 = pneg %p481
        %p691 = scmp.lt.s32.totalorder %s39, 1
        %s692 = scalar_select %p691, %s39, 1
        %s693 = scalar_lea.vmem %s3, %s692
        %p694 = scmp.lt.s32.totalorder %s39, 1
        %s695 = scalar_select %p694, %s39, 1
        %s696 = smul.addr %s695, 48
        %s697 = smul.addr %s696, 4
        %s698 = scalar_lea.vmem %s4, %s697
        %p699 = scmp.lt.s32.totalorder %s39, 1
        %s700 = scalar_select %p699, %s39, 1
        %s701 = scalar_lea.vmem %s6, %s700
        %p702 = scmp.lt.s32.totalorder %s39, 1
        %s703 = scalar_select %p702, %s39, 1
        %s704 = smul.addr %s703, 16
        %s705 = smul.addr %s704, 4
        %s706 = scalar_lea.vmem %s8, %s705
        %p708 = scmp.eq.s32.totalorder %s39, 0
        // Predicated region
        $region89: #{_forward.1} parent=79 // pred_check
          %p709 = pneg %p708
        $region90: #{_forward.1} parent=79 // pred_check_branch
          %711 = sbr.rel (%p709) target = $region92
        $region91: #{_forward.1} parent=79 // pred_region
          %v712 = vld [vmem:[%s0] sm:$0xff]
          %v713 = vld [vmem:[%s0 + $0x8] sm:$0xff]
          %v714 = vld [vmem:[%s0 + $0x10] sm:$0xff]
          %v715 = vld [vmem:[%s0 + $0x18] sm:$0xff]
          %716 = vst [vmem:[#allocation2] sm:$0xff] %v712
          %717 = vst [vmem:[#allocation2 + $0x8] sm:$0xff] %v713
          %718 = vst [vmem:[#allocation2 + $0x10] sm:$0xff] %v714
          %719 = vst [vmem:[#allocation2 + $0x18] sm:$0xff] %v715
        $region92: #{_forward.1} parent=79 // pred_fallthru
          _
        %v720 = vld [vmem:[#allocation2] sm:$0xff]
        %v721 = vld [vmem:[#allocation2 + $0x8] sm:$0xff]
        %v722 = vld [vmem:[#allocation2 + $0x10] sm:$0xff]
        %v723 = vld [vmem:[#allocation2 + $0x18] sm:$0xff]
        %v724 = vld [vmem:[%s693] sm:$0x1]
        %v725 = vmul.f32 %v720, %v720
        %v726 = vmul.f32 %v721, %v721
        %v727 = vmul.f32 %v722, %v722
        %v728 = vmul.f32 %v723, %v723
        %729 = vadd.xlane.f32.xlu0 %v725
        %v730 = vpop.xlane.xlu0 %729
        %731 = vadd.xlane.f32.xlu0 %v726
        %v732 = vpop.xlane.xlu0 %731
        %733 = vadd.xlane.f32.xlu0 %v727
        %v734 = vpop.xlane.xlu0 %733
        %735 = vadd.xlane.f32.xlu0 %v728
        %v736 = vpop.xlane.xlu0 %735
        %v737 = vmul.f32 %v730, 0.03125
        %v738 = vmul.f32 %v732, 0.03125
        %v739 = vmul.f32 %v734, 0.03125
        %v740 = vmul.f32 %v736, 0.03125
        %v741 = vadd.f32 %v737, 1e-06
        %v742 = vadd.f32 %v738, 1e-06
        %v743 = vadd.f32 %v739, 1e-06
        %v744 = vadd.f32 %v740, 1e-06
        %v745 = vrsqrt.pop %v741
        %v746 = vrsqrt.pop %v742
        %v747 = vrsqrt.pop %v743
        %v748 = vrsqrt.pop %v744
        %v749 = vmul.f32 %v720, %v745
        %v750 = vmul.f32 %v721, %v746
        %v751 = vmul.f32 %v722, %v747
        %v752 = vmul.f32 %v723, %v748
        %v754 = vlaneseq
        %v755 = vshrl.u32 %v754, 7
        %v756 = vsub.s32 0, %v755
        %v757 = vrot.slane %v724, %v756
        %v759 = vmul.f32 %v749, %v757
        %v760 = vmul.f32 %v750, %v757
        %v761 = vmul.f32 %v751, %v757
        %v762 = vmul.f32 %v752, %v757
        %v763 = vpack.c.bf16 %v760, %v759
        %v764 = vpack.c.bf16 %v762, %v761
        %v765 = vld [vmem:[%s698] sm:$0xff]
        %v766 = vld [vmem:[%s698 + $0x8] sm:$0xf]
        %v767 = vld [vmem:[%s698 + $0xc] sm:$0xff]
        %v768 = vld [vmem:[%s698 + $0x14] sm:$0xf]
        %v769 = vld [vmem:[%s698 + $0x18] sm:$0xff]
        %v770 = vld [vmem:[%s698 + $0x20] sm:$0xf]
        %v771 = vld [vmem:[%s698 + $0x24] sm:$0xff]
        %v772 = vld [vmem:[%s698 + $0x2c] sm:$0xf]
        %v773 = vld [vmem:[%s698 + $0x30] sm:$0xff]
        %v774 = vld [vmem:[%s698 + $0x38] sm:$0xf]
        %v775 = vld [vmem:[%s698 + $0x3c] sm:$0xff]
        %v776 = vld [vmem:[%s698 + $0x44] sm:$0xf]
        %v777 = vld [vmem:[%s698 + $0x48] sm:$0xff]
        %v778 = vld [vmem:[%s698 + $0x50] sm:$0xf]
        %v779 = vld [vmem:[%s698 + $0x54] sm:$0xff]
        %v780 = vld [vmem:[%s698 + $0x5c] sm:$0xf]
        %v781 = vld [vmem:[%s698 + $0x60] sm:$0xff]
        %v782 = vld [vmem:[%s698 + $0x68] sm:$0xf]
        %v783 = vld [vmem:[%s698 + $0x6c] sm:$0xff]
        %v784 = vld [vmem:[%s698 + $0x74] sm:$0xf]
        %v785 = vld [vmem:[%s698 + $0x78] sm:$0xff]
        %v786 = vld [vmem:[%s698 + $0x80] sm:$0xf]
        %v787 = vld [vmem:[%s698 + $0x84] sm:$0xff]
        %v788 = vld [vmem:[%s698 + $0x8c] sm:$0xf]
        %v789 = vld [vmem:[%s698 + $0x90] sm:$0xff]
        %v790 = vld [vmem:[%s698 + $0x98] sm:$0xf]
        %v791 = vld [vmem:[%s698 + $0x9c] sm:$0xff]
        %v792 = vld [vmem:[%s698 + $0xa4] sm:$0xf]
        %v793 = vld [vmem:[%s698 + $0xa8] sm:$0xff]
        %v794 = vld [vmem:[%s698 + $0xb0] sm:$0xf]
        %v795 = vld [vmem:[%s698 + $0xb4] sm:$0xff]
        %v796 = vld [vmem:[%s698 + $0xbc] sm:$0xf]
        %v829 = vunpack.c.l.b16 %v765
        %v830 = vunpack.c.h.b16 %v765
        %v831 = vunpack.c.l.b16 %v766
        %v832 = vunpack.c.l.b16 %v767
        %v833 = vunpack.c.h.b16 %v767
        %v834 = vunpack.c.l.b16 %v768
        %v835 = vunpack.c.l.b16 %v769
        %v836 = vunpack.c.h.b16 %v769
        %v837 = vunpack.c.l.b16 %v770
        %v838 = vunpack.c.l.b16 %v771
        %v839 = vunpack.c.h.b16 %v771
        %v840 = vunpack.c.l.b16 %v772
        %v841 = vunpack.c.l.b16 %v773
        %v842 = vunpack.c.h.b16 %v773
        %v843 = vunpack.c.l.b16 %v774
        %v844 = vunpack.c.l.b16 %v775
        %v845 = vunpack.c.h.b16 %v775
        %v846 = vunpack.c.l.b16 %v776
        %v847 = vunpack.c.l.b16 %v777
        %v848 = vunpack.c.h.b16 %v777
        %v849 = vunpack.c.l.b16 %v778
        %v850 = vunpack.c.l.b16 %v779
        %v851 = vunpack.c.h.b16 %v779
        %v852 = vunpack.c.l.b16 %v780
        %v853 = vunpack.c.l.b16 %v781
        %v854 = vunpack.c.h.b16 %v781
        %v855 = vunpack.c.l.b16 %v782
        %v856 = vunpack.c.l.b16 %v783
        %v857 = vunpack.c.h.b16 %v783
        %v858 = vunpack.c.l.b16 %v784
        %v859 = vunpack.c.l.b16 %v785
        %v860 = vunpack.c.h.b16 %v785
        %v861 = vunpack.c.l.b16 %v786
        %v862 = vunpack.c.l.b16 %v787
        %v863 = vunpack.c.h.b16 %v787
        %v864 = vunpack.c.l.b16 %v788
        %v865 = vunpack.c.l.b16 %v789
        %v866 = vunpack.c.h.b16 %v789
        %v867 = vunpack.c.l.b16 %v790
        %v868 = vunpack.c.l.b16 %v791
        %v869 = vunpack.c.h.b16 %v791
        %v870 = vunpack.c.l.b16 %v792
        %v871 = vunpack.c.l.b16 %v793
        %v872 = vunpack.c.h.b16 %v793
        %v873 = vunpack.c.l.b16 %v794
        %v874 = vunpack.c.l.b16 %v795
        %v875 = vunpack.c.h.b16 %v795
        %v876 = vunpack.c.l.b16 %v796
        %v877 = vpack.c.b16 %v832, %v829
        %v878 = vpack.c.b16 %v833, %v830
        %v879 = vpack.c.b16 %v834, %v831
        %v880 = vpack.c.b16 %v838, %v835
        %v881 = vpack.c.b16 %v839, %v836
        %v882 = vpack.c.b16 %v840, %v837
        %v883 = vpack.c.b16 %v844, %v841
        %v884 = vpack.c.b16 %v845, %v842
        %v885 = vpack.c.b16 %v846, %v843
        %v886 = vpack.c.b16 %v850, %v847
        %v887 = vpack.c.b16 %v851, %v848
        %v888 = vpack.c.b16 %v852, %v849
        %v889 = vpack.c.b16 %v856, %v853
        %v890 = vpack.c.b16 %v857, %v854
        %v891 = vpack.c.b16 %v858, %v855
        %v892 = vpack.c.b16 %v862, %v859
        %v893 = vpack.c.b16 %v863, %v860
        %v894 = vpack.c.b16 %v864, %v861
        %v895 = vpack.c.b16 %v868, %v865
        %v896 = vpack.c.b16 %v869, %v866
        %v897 = vpack.c.b16 %v870, %v867
        %v898 = vpack.c.b16 %v874, %v871
        %v899 = vpack.c.b16 %v875, %v872
        %v900 = vpack.c.b16 %v876, %v873
        %925 = vmatprep.subr.bf16.mxu0 %v899
        %926 = vmatpush1.bf16.msra.mxu0 %v898
        %927 = vmatprep.subr.bf16.mxu0 %v896
        %928 = vmatpush1.bf16.msra.mxu0 %v895
        %929 = vmatprep.subr.bf16.mxu0 %v893
        %930 = vmatpush1.bf16.msra.mxu0 %v892
        %931 = vmatprep.subr.bf16.mxu0 %v890
        %932 = vmatpush1.bf16.msra.mxu0 %v889
        %933 = vmatprep.subr.bf16.mxu0 %v887
        %934 = vmatpush1.bf16.msra.mxu0 %v886
        %935 = vmatprep.subr.bf16.mxu0 %v884
        %936 = vmatpush1.bf16.msra.mxu0 %v883
        %937 = vmatprep.subr.bf16.mxu0 %v881
        %938 = vmatpush1.bf16.msra.mxu0 %v880
        %939 = vmatprep.subr.bf16.mxu0 %v878
        %940 = vmatpush1.bf16.msra.mxu0 %v877
        %941 = vmatprep.subr.bf16.mxu0 0
        %942 = vmatpush2.bf16.msra.mxu0 0
        %943 = vmatprep.subr.bf16.mxu0 0
        %944 = vmatpush2.bf16.msra.mxu0 0
        %945 = vmatprep.subr.bf16.mxu0 0
        %946 = vmatpush2.bf16.msra.mxu0 0
        %947 = vmatprep.subr.bf16.mxu0 0
        %948 = vmatpush2.bf16.msra.mxu0 0
        %949 = vmatprep.subr.bf16.mxu0 0
        %950 = vmatpush2.bf16.msra.mxu0 0
        %951 = vmatprep.subr.bf16.mxu0 0
        %952 = vmatpush2.bf16.msra.mxu0 0
        %953 = vmatprep.subr.bf16.mxu0 0
        %954 = vmatpush2.bf16.msra.mxu0 0
        %955 = vmatprep.subr.bf16.mxu0 0
        %956 = vmatpush2.bf16.msra.mxu0 0
        %957 = vmatprep.mubr.bf16.mxu0 0
        %958 = vmatmul.mubr.bf16.gmra.mxu0 %v763
        %v959 = vpop.f32.mrf.mxu0
        %v960 = vadd.f32 0.0, %v959
        %v961 = vpop.f32.mrf.mxu0
        %v962 = vadd.f32 0.0, %v961
        %v963 = vpop.f32.mrf.mxu0
        %v964 = vadd.f32 0.0, %v963
        %v965 = vpop.f32.mrf.mxu0
        %v966 = vadd.f32 0.0, %v965
        %967 = vmatprep.mubr.bf16.mxu0 0
        %968 = vmatmul.mubr.bf16.gmra.mxu0 %v764
        %v969 = vpop.f32.mrf.mxu0
        %v970 = vadd.f32 0.0, %v969
        %v971 = vpop.f32.mrf.mxu0
        %v972 = vadd.f32 0.0, %v971
        %v973 = vpop.f32.mrf.mxu0
        %v974 = vadd.f32 0.0, %v973
        %v975 = vpop.f32.mrf.mxu0
        %v976 = vadd.f32 0.0, %v975
        %977 = vdwg.mxu0
        %978 = vmatprep.subr.bf16.mxu0 0
        %979 = vmatpush1.bf16.msra.mxu0 %v900
        %980 = vmatprep.subr.bf16.mxu0 0
        %981 = vmatpush1.bf16.msra.mxu0 %v897
        %982 = vmatprep.subr.bf16.mxu0 0
        %983 = vmatpush1.bf16.msra.mxu0 %v894
        %984 = vmatprep.subr.bf16.mxu0 0
        %985 = vmatpush1.bf16.msra.mxu0 %v891
        %986 = vmatprep.subr.bf16.mxu0 0
        %987 = vmatpush1.bf16.msra.mxu0 %v888
        %988 = vmatprep.subr.bf16.mxu0 0
        %989 = vmatpush1.bf16.msra.mxu0 %v885
        %990 = vmatprep.subr.bf16.mxu0 0
        %991 = vmatpush1.bf16.msra.mxu0 %v882
        %992 = vmatprep.subr.bf16.mxu0 0
        %993 = vmatpush1.bf16.msra.mxu0 %v879
        %994 = vmatprep.subr.bf16.mxu0 0
        %995 = vmatpush2.bf16.msra.mxu0 0
        %996 = vmatprep.subr.bf16.mxu0 0
        %997 = vmatpush2.bf16.msra.mxu0 0
        %998 = vmatprep.subr.bf16.mxu0 0
        %999 = vmatpush2.bf16.msra.mxu0 0
        %1000 = vmatprep.subr.bf16.mxu0 0
        %1001 = vmatpush2.bf16.msra.mxu0 0
        %1002 = vmatprep.subr.bf16.mxu0 0
        %1003 = vmatpush2.bf16.msra.mxu0 0
        %1004 = vmatprep.subr.bf16.mxu0 0
        %1005 = vmatpush2.bf16.msra.mxu0 0
        %1006 = vmatprep.subr.bf16.mxu0 0
        %1007 = vmatpush2.bf16.msra.mxu0 0
        %1008 = vmatprep.subr.bf16.mxu0 0
        %1009 = vmatpush2.bf16.msra.mxu0 0
        %1010 = vmatprep.mubr.bf16.mxu0 0
        %1011 = vmatmul.mubr.bf16.gmra.mxu0 %v763
        %v1012 = vpop.f32.mrf.mxu0
        %v1013 = vadd.f32 0.0, %v1012
        %v1014 = vpop.f32.mrf.mxu0
        %v1015 = vpop.f32.mrf.mxu0
        %v1016 = vadd.f32 0.0, %v1015
        %v1017 = vpop.f32.mrf.mxu0
        %1018 = vmatprep.mubr.bf16.mxu0 0
        %1019 = vmatmul.mubr.bf16.gmra.mxu0 %v764
        %v1020 = vpop.f32.mrf.mxu0
        %v1021 = vadd.f32 0.0, %v1020
        %v1022 = vpop.f32.mrf.mxu0
        %v1023 = vpop.f32.mrf.mxu0
        %v1024 = vadd.f32 0.0, %v1023
        %v1025 = vpop.f32.mrf.mxu0
        %1026 = vdwg.mxu0
        %1027 = vmatprep.subr.mxu0 0.0
        %1028 = vmatpush1.xpose.msra.mxu0 0.0
        %1029 = vmatprep.subr.mxu0 0.0
        %1030 = vmatpush1.xpose.msra.mxu0 0.0
        %1031 = vmatprep.subr.mxu0 0.0
        %1032 = vmatpush1.xpose.msra.mxu0 0.0
        %1033 = vmatprep.subr.mxu0 0.0
        %1034 = vmatpush1.xpose.msra.mxu0 0.0
        %1035 = vmatprep.subr.mxu0 0.0
        %1036 = vmatpush1.xpose.msra.mxu0 0.0
        %1037 = vmatprep.subr.mxu0 0.0
        %1038 = vmatpush1.xpose.msra.mxu0 0.0
        %1039 = vmatprep.subr.mxu0 0.0
        %1040 = vmatpush1.xpose.msra.mxu0 0.0
        %1041 = vmatprep.subr.mxu0 0.0
        %1042 = vmatpush1.xpose.msra.mxu0 0.0
        %1043 = vmatprep.subr.mxu0 0.0
        %1044 = vmatpush1.xpose.msra.mxu0 0.0
        %1045 = vmatprep.subr.mxu0 0.0
        %1046 = vmatpush1.xpose.msra.mxu0 0.0
        %1047 = vmatprep.subr.mxu0 0.0
        %1048 = vmatpush1.xpose.msra.mxu0 0.0
        %1049 = vmatprep.subr.mxu0 0.0
        %1050 = vmatpush1.xpose.msra.mxu0 0.0
        %1051 = vmatprep.subr.mxu0 0.0
        %1052 = vmatpush1.xpose.msra.mxu0 %v976
        %1053 = vmatprep.subr.mxu0 0.0
        %1054 = vmatpush1.xpose.msra.mxu0 %v972
        %1055 = vmatprep.subr.mxu0 0.0
        %1056 = vmatpush1.xpose.msra.mxu0 %v966
        %1057 = vmatprep.subr.mxu0 0.0
        %1058 = vmatpush1.xpose.msra.mxu0 %v962
        %1059 = vmatprep.subr.mxu0 0.0
        %1060 = vmatpush2.xpose.msra.mxu0 0.0
        %1061 = vmatprep.subr.mxu0 0.0
        %1062 = vmatpush2.xpose.msra.mxu0 0.0
        %1063 = vmatprep.subr.mxu0 0.0
        %1064 = vmatpush2.xpose.msra.mxu0 0.0
        %1065 = vmatprep.subr.mxu0 0.0
        %1066 = vmatpush2.xpose.msra.mxu0 0.0
        %1067 = vmatprep.subr.mxu0 0.0
        %1068 = vmatpush2.xpose.msra.mxu0 0.0
        %1069 = vmatprep.subr.mxu0 0.0
        %1070 = vmatpush2.xpose.msra.mxu0 0.0
        %1071 = vmatprep.subr.mxu0 0.0
        %1072 = vmatpush2.xpose.msra.mxu0 0.0
        %1073 = vmatprep.subr.mxu0 0.0
        %1074 = vmatpush2.xpose.msra.mxu0 0.0
        %1075 = vmatprep.subr.mxu0 0.0
        %1076 = vmatpush2.xpose.msra.mxu0 0.0
        %1077 = vmatprep.subr.mxu0 0.0
        %1078 = vmatpush2.xpose.msra.mxu0 0.0
        %1079 = vmatprep.subr.mxu0 0.0
        %1080 = vmatpush2.xpose.msra.mxu0 0.0
        %1081 = vmatprep.subr.mxu0 0.0
        %1082 = vmatpush2.xpose.msra.mxu0 0.0
        %1083 = vmatprep.subr.mxu0 0.0
        %1084 = vmatpush2.xpose.msra.mxu0 0.0
        %1085 = vmatprep.subr.mxu0 0.0
        %1086 = vmatpush2.xpose.msra.mxu0 0.0
        %1087 = vmatprep.subr.mxu0 0.0
        %1088 = vmatpush2.xpose.msra.mxu0 0.0
        %1089 = vmatprep.subr.mxu0 0.0
        %1090 = vmatpush2.xpose.msra.mxu0 0.0
        %1091 = vmatprep.mubr.f32.mxu0 0.0
        %1092 = vmatmul.mubr.f32.gmra.mxu0 %v960
        %v1093 = vpop.f32.mrf.mxu0
        %v1094 = vadd.f32 0.0, %v1093
        %v1095 = vpop.f32.mrf.mxu0
        %1096 = vmatprep.mubr.f32.mxu0 0.0
        %1097 = vmatmul.mubr.f32.gmra.mxu0 %v964
        %v1098 = vpop.f32.mrf.mxu0
        %v1099 = vadd.f32 0.0, %v1098
        %v1100 = vpop.f32.mrf.mxu0
        %1101 = vmatprep.mubr.f32.mxu0 0.0
        %1102 = vmatmul.mubr.f32.gmra.mxu0 %v970
        %v1103 = vpop.f32.mrf.mxu0
        %v1104 = vadd.f32 0.0, %v1103
        %v1105 = vpop.f32.mrf.mxu0
        %1106 = vmatprep.mubr.f32.mxu0 0.0
        %1107 = vmatmul.mubr.f32.gmra.mxu0 %v974
        %v1108 = vpop.f32.mrf.mxu0
        %v1109 = vadd.f32 0.0, %v1108
        %v1110 = vpop.f32.mrf.mxu0
        %1111 = vdwg.mxu0
        %v1112 = vmul.f32 %v1094, 0.17677669
        %v1113 = vmul.f32 %v1099, 0.17677669
        %v1114 = vmul.f32 %v1104, 0.17677669
        %v1115 = vmul.f32 %v1109, 0.17677669
        %v1116 = vld [vmem:[%s1] sm:$0xff]
        %v1117 = vld [vmem:[%s1 + $0x8] sm:$0xff]
        %v1118 = vld [vmem:[%s1 + $0x10] sm:$0xff]
        %v1119 = vld [vmem:[%s1 + $0x18] sm:$0xff]
        %v1120 = vadd.f32 %v1112, %v1116
        %v1121 = vadd.f32 %v1113, %v1117
        %v1122 = vadd.f32 %v1114, %v1118
        %v1123 = vadd.f32 %v1115, %v1119
        %vm1124 = vcmask 261120
        %v1125 = vsel %vm1124, %v1120, -inf
        %1126 = vmax.xlane.f32.xlu0 %v1125
        %v1127 = vpop.xlane.xlu0 %1126
        %v1128 = vsel %vm1124, %v1121, -inf
        %1129 = vmax.xlane.f32.xlu0 %v1128
        %v1130 = vpop.xlane.xlu0 %1129
        %v1131 = vsel %vm1124, %v1122, -inf
        %1132 = vmax.xlane.f32.xlu0 %v1131
        %v1133 = vpop.xlane.xlu0 %1132
        %v1134 = vsel %vm1124, %v1123, -inf
        %1135 = vmax.xlane.f32.xlu0 %v1134
        %v1136 = vpop.xlane.xlu0 %1135
        %v1137 = vsub.f32 %v1120, %v1127
        %v1138 = vsub.f32 %v1121, %v1130
        %v1139 = vsub.f32 %v1122, %v1133
        %v1140 = vsub.f32 %v1123, %v1136
        %v1141 = vmul.f32 %v1137, 1.442695
        %v1142 = vpow.pop %v1141
        %v1143 = vmul.f32 %v1138, 1.442695
        %v1144 = vpow.pop %v1143
        %v1145 = vmul.f32 %v1139, 1.442695
        %v1146 = vpow.pop %v1145
        %v1147 = vmul.f32 %v1140, 1.442695
        %v1148 = vpow.pop %v1147
        %v1149 = vsel %vm1124, %v1142, 0.0
        %1150 = vadd.xlane.f32.xlu0 %v1149
        %v1151 = vpop.xlane.xlu0 %1150
        %v1152 = vsel %vm1124, %v1144, 0.0
        %1153 = vadd.xlane.f32.xlu0 %v1152
        %v1154 = vpop.xlane.xlu0 %1153
        %v1155 = vsel %vm1124, %v1146, 0.0
        %1156 = vadd.xlane.f32.xlu0 %v1155
        %v1157 = vpop.xlane.xlu0 %1156
        %v1158 = vsel %vm1124, %v1148, 0.0
        %1159 = vadd.xlane.f32.xlu0 %v1158
        %v1160 = vpop.xlane.xlu0 %1159
        %v1161 = vrcp.pop %v1151
        %v1162 = vrcp.pop %v1154
        %v1163 = vrcp.pop %v1157
        %v1164 = vrcp.pop %v1160
        %v1165 = vmul.f32 %v1142, %v1161
        %v1166 = vmul.f32 %v1144, %v1162
        %v1167 = vmul.f32 %v1146, %v1163
        %v1168 = vmul.f32 %v1148, %v1164
        %v1170 = vsel %vm1124, %v1165, 0
        %v1173 = vsel %vm1124, %v1166, 0
        %v1176 = vsel %vm1124, %v1167, 0
        %v1179 = vsel %vm1124, %v1168, 0
        %1181 = vmatprep.subr.mxu0 0.0
        %1182 = vmatpush1.msra.mxu0 0.0
        %1183 = vmatprep.subr.mxu0 0.0
        %1184 = vmatpush1.msra.mxu0 0.0
        %1185 = vmatprep.subr.mxu0 0.0
        %1186 = vmatpush1.msra.mxu0 0.0
        %1187 = vmatprep.subr.mxu0 0.0
        %1188 = vmatpush1.msra.mxu0 0.0
        %1189 = vmatprep.subr.mxu0 0.0
        %1190 = vmatpush1.msra.mxu0 0.0
        %1191 = vmatprep.subr.mxu0 0.0
        %1192 = vmatpush1.msra.mxu0 0.0
        %1193 = vmatprep.subr.mxu0 0.0
        %1194 = vmatpush1.msra.mxu0 0.0
        %1195 = vmatprep.subr.mxu0 0.0
        %1196 = vmatpush1.msra.mxu0 0.0
        %1197 = vmatprep.subr.mxu0 0.0
        %1198 = vmatpush1.msra.mxu0 0.0
        %1199 = vmatprep.subr.mxu0 0.0
        %1200 = vmatpush1.msra.mxu0 0.0
        %1201 = vmatprep.subr.mxu0 0.0
        %1202 = vmatpush1.msra.mxu0 0.0
        %1203 = vmatprep.subr.mxu0 0.0
        %1204 = vmatpush1.msra.mxu0 0.0
        %1205 = vmatprep.subr.mxu0 0.0
        %1206 = vmatpush1.msra.mxu0 %v1024
        %1207 = vmatprep.subr.mxu0 0.0
        %1208 = vmatpush1.msra.mxu0 %v1021
        %1209 = vmatprep.subr.mxu0 0.0
        %1210 = vmatpush1.msra.mxu0 %v1016
        %1211 = vmatprep.subr.mxu0 0.0
        %1212 = vmatpush1.msra.mxu0 %v1013
        %1213 = vmatprep.subr.mxu0 0.0
        %1214 = vmatpush2.msra.mxu0 0.0
        %1215 = vmatprep.subr.mxu0 0.0
        %1216 = vmatpush2.msra.mxu0 0.0
        %1217 = vmatprep.subr.mxu0 0.0
        %1218 = vmatpush2.msra.mxu0 0.0
        %1219 = vmatprep.subr.mxu0 0.0
        %1220 = vmatpush2.msra.mxu0 0.0
        %1221 = vmatprep.subr.mxu0 0.0
        %1222 = vmatpush2.msra.mxu0 0.0
        %1223 = vmatprep.subr.mxu0 0.0
        %1224 = vmatpush2.msra.mxu0 0.0
        %1225 = vmatprep.subr.mxu0 0.0
        %1226 = vmatpush2.msra.mxu0 0.0
        %1227 = vmatprep.subr.mxu0 0.0
        %1228 = vmatpush2.msra.mxu0 0.0
        %1229 = vmatprep.subr.mxu0 0.0
        %1230 = vmatpush2.msra.mxu0 0.0
        %1231 = vmatprep.subr.mxu0 0.0
        %1232 = vmatpush2.msra.mxu0 0.0
        %1233 = vmatprep.subr.mxu0 0.0
        %1234 = vmatpush2.msra.mxu0 0.0
        %1235 = vmatprep.subr.mxu0 0.0
        %1236 = vmatpush2.msra.mxu0 0.0
        %1237 = vmatprep.subr.mxu0 0.0
        %1238 = vmatpush2.msra.mxu0 0.0
        %1239 = vmatprep.subr.mxu0 0.0
        %1240 = vmatpush2.msra.mxu0 0.0
        %1241 = vmatprep.subr.mxu0 0.0
        %1242 = vmatpush2.msra.mxu0 0.0
        %1243 = vmatprep.subr.mxu0 0.0
        %1244 = vmatpush2.msra.mxu0 0.0
        %1245 = vmatprep.mubr.f32.mxu0 0.0
        %1246 = vmatmul.mubr.f32.gmra.mxu0 %v1170
        %v1247 = vpop.f32.mrf.mxu0
        %v1248 = vadd.f32 0.0, %v1247
        %v1249 = vpop.f32.mrf.mxu0
        %1250 = vmatprep.mubr.f32.mxu0 0.0
        %1251 = vmatmul.mubr.f32.gmra.mxu0 %v1173
        %v1252 = vpop.f32.mrf.mxu0
        %v1253 = vadd.f32 0.0, %v1252
        %v1254 = vpop.f32.mrf.mxu0
        %1255 = vmatprep.mubr.f32.mxu0 0.0
        %1256 = vmatmul.mubr.f32.gmra.mxu0 %v1176
        %v1257 = vpop.f32.mrf.mxu0
        %v1258 = vadd.f32 0.0, %v1257
        %v1259 = vpop.f32.mrf.mxu0
        %1260 = vmatprep.mubr.f32.mxu0 0.0
        %1261 = vmatmul.mubr.f32.gmra.mxu0 %v1179
        %v1262 = vpop.f32.mrf.mxu0
        %v1263 = vadd.f32 0.0, %v1262
        %v1264 = vpop.f32.mrf.mxu0
        %1265 = vdwg.mxu0
        %v1266 = vpack.c.bf16 %v1253, %v1248
        %v1267 = vpack.c.bf16 %v1263, %v1258
        %v1268 = vld [vmem:[%s611] sm:$0xf]
        %v1269 = vld [vmem:[%s611 + $0x4] sm:$0xf]
        %v1270 = vld [vmem:[%s611 + $0x8] sm:$0xf]
        %v1271 = vld [vmem:[%s611 + $0xc] sm:$0xf]
        %v1272 = vld [vmem:[%s611 + $0x10] sm:$0xf]
        %v1273 = vld [vmem:[%s611 + $0x14] sm:$0xf]
        %v1274 = vld [vmem:[%s611 + $0x18] sm:$0xf]
        %v1275 = vld [vmem:[%s611 + $0x1c] sm:$0xf]
        %v1276 = vld [vmem:[%s611 + $0x20] sm:$0xf]
        %v1277 = vld [vmem:[%s611 + $0x24] sm:$0xf]
        %v1278 = vld [vmem:[%s611 + $0x28] sm:$0xf]
        %v1279 = vld [vmem:[%s611 + $0x2c] sm:$0xf]
        %v1280 = vld [vmem:[%s611 + $0x30] sm:$0xf]
        %v1281 = vld [vmem:[%s611 + $0x34] sm:$0xf]
        %v1282 = vld [vmem:[%s611 + $0x38] sm:$0xf]
        %v1283 = vld [vmem:[%s611 + $0x3c] sm:$0xf]
        %v1300 = vunpack.c.l.b16 %v1268
        %v1301 = vunpack.c.l.b16 %v1269
        %v1302 = vunpack.c.l.b16 %v1270
        %v1303 = vunpack.c.l.b16 %v1271
        %v1304 = vunpack.c.l.b16 %v1272
        %v1305 = vunpack.c.l.b16 %v1273
        %v1306 = vunpack.c.l.b16 %v1274
        %v1307 = vunpack.c.l.b16 %v1275
        %v1308 = vunpack.c.l.b16 %v1276
        %v1309 = vunpack.c.l.b16 %v1277
        %v1310 = vunpack.c.l.b16 %v1278
        %v1311 = vunpack.c.l.b16 %v1279
        %v1312 = vunpack.c.l.b16 %v1280
        %v1313 = vunpack.c.l.b16 %v1281
        %v1314 = vunpack.c.l.b16 %v1282
        %v1315 = vunpack.c.l.b16 %v1283
        %v1316 = vpack.c.b16 %v1301, %v1300
        %v1317 = vpack.c.b16 %v1303, %v1302
        %v1318 = vpack.c.b16 %v1305, %v1304
        %v1319 = vpack.c.b16 %v1307, %v1306
        %v1320 = vpack.c.b16 %v1309, %v1308
        %v1321 = vpack.c.b16 %v1311, %v1310
        %v1322 = vpack.c.b16 %v1313, %v1312
        %v1323 = vpack.c.b16 %v1315, %v1314
        %1332 = vmatprep.subr.bf16.mxu0 0
        %1333 = vmatpush1.bf16.msra.mxu0 %v1323
        %1334 = vmatprep.subr.bf16.mxu0 0
        %1335 = vmatpush1.bf16.msra.mxu0 %v1322
        %1336 = vmatprep.subr.bf16.mxu0 0
        %1337 = vmatpush1.bf16.msra.mxu0 %v1321
        %1338 = vmatprep.subr.bf16.mxu0 0
        %1339 = vmatpush1.bf16.msra.mxu0 %v1320
        %1340 = vmatprep.subr.bf16.mxu0 0
        %1341 = vmatpush1.bf16.msra.mxu0 %v1319
        %1342 = vmatprep.subr.bf16.mxu0 0
        %1343 = vmatpush1.bf16.msra.mxu0 %v1318
        %1344 = vmatprep.subr.bf16.mxu0 0
        %1345 = vmatpush1.bf16.msra.mxu0 %v1317
        %1346 = vmatprep.subr.bf16.mxu0 0
        %1347 = vmatpush1.bf16.msra.mxu0 %v1316
        %1348 = vmatprep.subr.bf16.mxu0 0
        %1349 = vmatpush2.bf16.msra.mxu0 0
        %1350 = vmatprep.subr.bf16.mxu0 0
        %1351 = vmatpush2.bf16.msra.mxu0 0
        %1352 = vmatprep.subr.bf16.mxu0 0
        %1353 = vmatpush2.bf16.msra.mxu0 0
        %1354 = vmatprep.subr.bf16.mxu0 0
        %1355 = vmatpush2.bf16.msra.mxu0 0
        %1356 = vmatprep.subr.bf16.mxu0 0
        %1357 = vmatpush2.bf16.msra.mxu0 0
        %1358 = vmatprep.subr.bf16.mxu0 0
        %1359 = vmatpush2.bf16.msra.mxu0 0
        %1360 = vmatprep.subr.bf16.mxu0 0
        %1361 = vmatpush2.bf16.msra.mxu0 0
        %1362 = vmatprep.subr.bf16.mxu0 0
        %1363 = vmatpush2.bf16.msra.mxu0 0
        %1364 = vmatprep.mubr.bf16.mxu0 0
        %1365 = vmatmul.mubr.bf16.gmra.mxu0 %v1266
        %v1366 = vpop.f32.mrf.mxu0
        %v1367 = vadd.f32 0.0, %v1366
        %v1368 = vpop.f32.mrf.mxu0
        %v1369 = vpop.f32.mrf.mxu0
        %v1370 = vadd.f32 0.0, %v1369
        %v1371 = vpop.f32.mrf.mxu0
        %1372 = vmatprep.mubr.bf16.mxu0 0
        %1373 = vmatmul.mubr.bf16.gmra.mxu0 %v1267
        %v1374 = vpop.f32.mrf.mxu0
        %v1375 = vadd.f32 0.0, %v1374
        %v1376 = vpop.f32.mrf.mxu0
        %v1377 = vpop.f32.mrf.mxu0
        %v1378 = vadd.f32 0.0, %v1377
        %v1379 = vpop.f32.mrf.mxu0
        %1380 = vdwg.mxu0
        %v1381 = vadd.f32 %v720, %v1367
        %v1382 = vadd.f32 %v721, %v1370
        %v1383 = vadd.f32 %v722, %v1375
        %v1384 = vadd.f32 %v723, %v1378
        %v1385 = vld [vmem:[%s701] sm:$0x1]
        %v1386 = vmul.f32 %v1381, %v1381
        %v1387 = vmul.f32 %v1382, %v1382
        %v1388 = vmul.f32 %v1383, %v1383
        %v1389 = vmul.f32 %v1384, %v1384
        %1390 = vadd.xlane.f32.xlu0 %v1386
        %v1391 = vpop.xlane.xlu0 %1390
        %1392 = vadd.xlane.f32.xlu0 %v1387
        %v1393 = vpop.xlane.xlu0 %1392
        %1394 = vadd.xlane.f32.xlu0 %v1388
        %v1395 = vpop.xlane.xlu0 %1394
        %1396 = vadd.xlane.f32.xlu0 %v1389
        %v1397 = vpop.xlane.xlu0 %1396
        %v1398 = vmul.f32 %v1391, 0.03125
        %v1399 = vmul.f32 %v1393, 0.03125
        %v1400 = vmul.f32 %v1395, 0.03125
        %v1401 = vmul.f32 %v1397, 0.03125
        %v1402 = vadd.f32 %v1398, 1e-06
        %v1403 = vadd.f32 %v1399, 1e-06
        %v1404 = vadd.f32 %v1400, 1e-06
        %v1405 = vadd.f32 %v1401, 1e-06
        %v1406 = vrsqrt.pop %v1402
        %v1407 = vrsqrt.pop %v1403
        %v1408 = vrsqrt.pop %v1404
        %v1409 = vrsqrt.pop %v1405
        %v1410 = vmul.f32 %v1381, %v1406
        %v1411 = vmul.f32 %v1382, %v1407
        %v1412 = vmul.f32 %v1383, %v1408
        %v1413 = vmul.f32 %v1384, %v1409
        %v1415 = vlaneseq
        %v1416 = vshrl.u32 %v1415, 7
        %v1417 = vsub.s32 0, %v1416
        %v1418 = vrot.slane %v1385, %v1417
        %v1420 = vmul.f32 %v1410, %v1418
        %v1421 = vmul.f32 %v1411, %v1418
        %v1422 = vmul.f32 %v1412, %v1418
        %v1423 = vmul.f32 %v1413, %v1418
        %v1424 = vpack.c.bf16 %v1421, %v1420
        %v1425 = vpack.c.bf16 %v1423, %v1422
        %v1426 = vld [vmem:[%s620] sm:$0xff]
        %v1427 = vld [vmem:[%s620 + $0x8] sm:$0xff]
        %v1428 = vld [vmem:[%s620 + $0x10] sm:$0xff]
        %v1429 = vld [vmem:[%s620 + $0x18] sm:$0xff]
        %v1430 = vld [vmem:[%s620 + $0x20] sm:$0xff]
        %v1431 = vld [vmem:[%s620 + $0x28] sm:$0xff]
        %v1432 = vld [vmem:[%s620 + $0x30] sm:$0xff]
        %v1433 = vld [vmem:[%s620 + $0x38] sm:$0xff]
        %v1434 = vld [vmem:[%s620 + $0x40] sm:$0xff]
        %v1435 = vld [vmem:[%s620 + $0x48] sm:$0xff]
        %v1436 = vld [vmem:[%s620 + $0x50] sm:$0xff]
        %v1437 = vld [vmem:[%s620 + $0x58] sm:$0xff]
        %v1438 = vld [vmem:[%s620 + $0x60] sm:$0xff]
        %v1439 = vld [vmem:[%s620 + $0x68] sm:$0xff]
        %v1440 = vld [vmem:[%s620 + $0x70] sm:$0xff]
        %v1441 = vld [vmem:[%s620 + $0x78] sm:$0xff]
        %v1458 = vunpack.c.l.b16 %v1426
        %v1459 = vunpack.c.h.b16 %v1426
        %v1460 = vunpack.c.l.b16 %v1427
        %v1461 = vunpack.c.h.b16 %v1427
        %v1462 = vunpack.c.l.b16 %v1428
        %v1463 = vunpack.c.h.b16 %v1428
        %v1464 = vunpack.c.l.b16 %v1429
        %v1465 = vunpack.c.h.b16 %v1429
        %v1466 = vunpack.c.l.b16 %v1430
        %v1467 = vunpack.c.h.b16 %v1430
        %v1468 = vunpack.c.l.b16 %v1431
        %v1469 = vunpack.c.h.b16 %v1431
        %v1470 = vunpack.c.l.b16 %v1432
        %v1471 = vunpack.c.h.b16 %v1432
        %v1472 = vunpack.c.l.b16 %v1433
        %v1473 = vunpack.c.h.b16 %v1433
        %v1474 = vunpack.c.l.b16 %v1434
        %v1475 = vunpack.c.h.b16 %v1434
        %v1476 = vunpack.c.l.b16 %v1435
        %v1477 = vunpack.c.h.b16 %v1435
        %v1478 = vunpack.c.l.b16 %v1436
        %v1479 = vunpack.c.h.b16 %v1436
        %v1480 = vunpack.c.l.b16 %v1437
        %v1481 = vunpack.c.h.b16 %v1437
        %v1482 = vunpack.c.l.b16 %v1438
        %v1483 = vunpack.c.h.b16 %v1438
        %v1484 = vunpack.c.l.b16 %v1439
        %v1485 = vunpack.c.h.b16 %v1439
        %v1486 = vunpack.c.l.b16 %v1440
        %v1487 = vunpack.c.h.b16 %v1440
        %v1488 = vunpack.c.l.b16 %v1441
        %v1489 = vunpack.c.h.b16 %v1441
        %v1490 = vpack.c.b16 %v1460, %v1458
        %v1491 = vpack.c.b16 %v1461, %v1459
        %v1492 = vpack.c.b16 %v1464, %v1462
        %v1493 = vpack.c.b16 %v1465, %v1463
        %v1494 = vpack.c.b16 %v1468, %v1466
        %v1495 = vpack.c.b16 %v1469, %v1467
        %v1496 = vpack.c.b16 %v1472, %v1470
        %v1497 = vpack.c.b16 %v1473, %v1471
        %v1498 = vpack.c.b16 %v1476, %v1474
        %v1499 = vpack.c.b16 %v1477, %v1475
        %v1500 = vpack.c.b16 %v1480, %v1478
        %v1501 = vpack.c.b16 %v1481, %v1479
        %v1502 = vpack.c.b16 %v1484, %v1482
        %v1503 = vpack.c.b16 %v1485, %v1483
        %v1504 = vpack.c.b16 %v1488, %v1486
        %v1505 = vpack.c.b16 %v1489, %v1487
        %1522 = vmatprep.subr.bf16.mxu0 %v1505
        %1523 = vmatpush1.bf16.msra.mxu0 %v1504
        %1524 = vmatprep.subr.bf16.mxu0 %v1503
        %1525 = vmatpush1.bf16.msra.mxu0 %v1502
        %1526 = vmatprep.subr.bf16.mxu0 %v1501
        %1527 = vmatpush1.bf16.msra.mxu0 %v1500
        %1528 = vmatprep.subr.bf16.mxu0 %v1499
        %1529 = vmatpush1.bf16.msra.mxu0 %v1498
        %1530 = vmatprep.subr.bf16.mxu0 %v1497
        %1531 = vmatpush1.bf16.msra.mxu0 %v1496
        %1532 = vmatprep.subr.bf16.mxu0 %v1495
        %1533 = vmatpush1.bf16.msra.mxu0 %v1494
        %1534 = vmatprep.subr.bf16.mxu0 %v1493
        %1535 = vmatpush1.bf16.msra.mxu0 %v1492
        %1536 = vmatprep.subr.bf16.mxu0 %v1491
        %1537 = vmatpush1.bf16.msra.mxu0 %v1490
        %1538 = vmatprep.subr.bf16.mxu0 0
        %1539 = vmatpush2.bf16.msra.mxu0 0
        %1540 = vmatprep.subr.bf16.mxu0 0
        %1541 = vmatpush2.bf16.msra.mxu0 0
        %1542 = vmatprep.subr.bf16.mxu0 0
        %1543 = vmatpush2.bf16.msra.mxu0 0
        %1544 = vmatprep.subr.bf16.mxu0 0
        %1545 = vmatpush2.bf16.msra.mxu0 0
        %1546 = vmatprep.subr.bf16.mxu0 0
        %1547 = vmatpush2.bf16.msra.mxu0 0
        %1548 = vmatprep.subr.bf16.mxu0 0
        %1549 = vmatpush2.bf16.msra.mxu0 0
        %1550 = vmatprep.subr.bf16.mxu0 0
        %1551 = vmatpush2.bf16.msra.mxu0 0
        %1552 = vmatprep.subr.bf16.mxu0 0
        %1553 = vmatpush2.bf16.msra.mxu0 0
        %1554 = vmatprep.mubr.bf16.mxu0 0
        %1555 = vmatmul.mubr.bf16.gmra.mxu0 %v1424
        %v1556 = vpop.f32.mrf.mxu0
        %v1557 = vadd.f32 0.0, %v1556
        %v1558 = vpop.f32.mrf.mxu0
        %v1559 = vadd.f32 0.0, %v1558
        %v1560 = vpop.f32.mrf.mxu0
        %v1561 = vadd.f32 0.0, %v1560
        %v1562 = vpop.f32.mrf.mxu0
        %v1563 = vadd.f32 0.0, %v1562
        %1564 = vmatprep.mubr.bf16.mxu0 0
        %1565 = vmatmul.mubr.bf16.gmra.mxu0 %v1425
        %v1566 = vpop.f32.mrf.mxu0
        %v1567 = vadd.f32 0.0, %v1566
        %v1568 = vpop.f32.mrf.mxu0
        %v1569 = vadd.f32 0.0, %v1568
        %v1570 = vpop.f32.mrf.mxu0
        %v1571 = vadd.f32 0.0, %v1570
        %v1572 = vpop.f32.mrf.mxu0
        %v1573 = vadd.f32 0.0, %v1572
        %1574 = vdwg.mxu0
        %v1575 = vxor.u32 %v1557, 2147483648
        %v1576 = vxor.u32 %v1561, 2147483648
        %v1577 = vxor.u32 %v1567, 2147483648
        %v1578 = vxor.u32 %v1571, 2147483648
        %v1579 = vmul.f32 %v1575, 1.442695
        %v1580 = vpow.pop %v1579
        %v1581 = vmul.f32 %v1576, 1.442695
        %v1582 = vpow.pop %v1581
        %v1583 = vmul.f32 %v1577, 1.442695
        %v1584 = vpow.pop %v1583
        %v1585 = vmul.f32 %v1578, 1.442695
        %v1586 = vpow.pop %v1585
        %v1587 = vadd.f32 %v1580, 1.0
        %v1588 = vadd.f32 %v1582, 1.0
        %v1589 = vadd.f32 %v1584, 1.0
        %v1590 = vadd.f32 %v1586, 1.0
        %v1591 = vrcp.pop %v1587
        %v1592 = vmul.f32 1.0, %v1591
        %v1593 = vrcp.pop %v1588
        %v1594 = vmul.f32 1.0, %v1593
        %v1595 = vrcp.pop %v1589
        %v1596 = vmul.f32 1.0, %v1595
        %v1597 = vrcp.pop %v1590
        %v1598 = vmul.f32 1.0, %v1597
        %v1599 = vmul.f32 %v1557, %v1592
        %v1600 = vmul.f32 %v1561, %v1594
        %v1601 = vmul.f32 %v1567, %v1596
        %v1602 = vmul.f32 %v1571, %v1598
        %v1603 = vmul.f32 %v1599, %v1559
        %v1604 = vmul.f32 %v1600, %v1563
        %v1605 = vmul.f32 %v1601, %v1569
        %v1606 = vmul.f32 %v1602, %v1573
        %v1607 = vpack.c.bf16 %v1604, %v1603
        %v1608 = vpack.c.bf16 %v1606, %v1605
        %v1609 = vld [vmem:[%s706] sm:$0xf]
        %v1610 = vld [vmem:[%s706 + $0x4] sm:$0xf]
        %v1611 = vld [vmem:[%s706 + $0x8] sm:$0xf]
        %v1612 = vld [vmem:[%s706 + $0xc] sm:$0xf]
        %v1613 = vld [vmem:[%s706 + $0x10] sm:$0xf]
        %v1614 = vld [vmem:[%s706 + $0x14] sm:$0xf]
        %v1615 = vld [vmem:[%s706 + $0x18] sm:$0xf]
        %v1616 = vld [vmem:[%s706 + $0x1c] sm:$0xf]
        %v1617 = vld [vmem:[%s706 + $0x20] sm:$0xf]
        %v1618 = vld [vmem:[%s706 + $0x24] sm:$0xf]
        %v1619 = vld [vmem:[%s706 + $0x28] sm:$0xf]
        %v1620 = vld [vmem:[%s706 + $0x2c] sm:$0xf]
        %v1621 = vld [vmem:[%s706 + $0x30] sm:$0xf]
        %v1622 = vld [vmem:[%s706 + $0x34] sm:$0xf]
        %v1623 = vld [vmem:[%s706 + $0x38] sm:$0xf]
        %v1624 = vld [vmem:[%s706 + $0x3c] sm:$0xf]
        %v1641 = vunpack.c.l.b16 %v1609
        %v1642 = vunpack.c.l.b16 %v1610
        %v1643 = vunpack.c.l.b16 %v1611
        %v1644 = vunpack.c.l.b16 %v1612
        %v1645 = vunpack.c.l.b16 %v1613
        %v1646 = vunpack.c.l.b16 %v1614
        %v1647 = vunpack.c.l.b16 %v1615
        %v1648 = vunpack.c.l.b16 %v1616
        %v1649 = vunpack.c.l.b16 %v1617
        %v1650 = vunpack.c.l.b16 %v1618
        %v1651 = vunpack.c.l.b16 %v1619
        %v1652 = vunpack.c.l.b16 %v1620
        %v1653 = vunpack.c.l.b16 %v1621
        %v1654 = vunpack.c.l.b16 %v1622
        %v1655 = vunpack.c.l.b16 %v1623
        %v1656 = vunpack.c.l.b16 %v1624
        %v1657 = vpack.c.b16 %v1642, %v1641
        %v1658 = vpack.c.b16 %v1644, %v1643
        %v1659 = vpack.c.b16 %v1646, %v1645
        %v1660 = vpack.c.b16 %v1648, %v1647
        %v1661 = vpack.c.b16 %v1650, %v1649
        %v1662 = vpack.c.b16 %v1652, %v1651
        %v1663 = vpack.c.b16 %v1654, %v1653
        %v1664 = vpack.c.b16 %v1656, %v1655
        %1673 = vmatprep.subr.bf16.mxu0 0
        %1674 = vmatpush1.bf16.msra.mxu0 %v1664
        %1675 = vmatprep.subr.bf16.mxu0 0
        %1676 = vmatpush1.bf16.msra.mxu0 %v1663
        %1677 = vmatprep.subr.bf16.mxu0 0
        %1678 = vmatpush1.bf16.msra.mxu0 %v1662
        %1679 = vmatprep.subr.bf16.mxu0 0
        %1680 = vmatpush1.bf16.msra.mxu0 %v1661
        %1681 = vmatprep.subr.bf16.mxu0 0
        %1682 = vmatpush1.bf16.msra.mxu0 %v1660
        %1683 = vmatprep.subr.bf16.mxu0 0
        %1684 = vmatpush1.bf16.msra.mxu0 %v1659
        %1685 = vmatprep.subr.bf16.mxu0 0
        %1686 = vmatpush1.bf16.msra.mxu0 %v1658
        %1687 = vmatprep.subr.bf16.mxu0 0
        %1688 = vmatpush1.bf16.msra.mxu0 %v1657
        %1689 = vmatprep.subr.bf16.mxu0 0
        %1690 = vmatpush2.bf16.msra.mxu0 0
        %1691 = vmatprep.subr.bf16.mxu0 0
        %1692 = vmatpush2.bf16.msra.mxu0 0
        %1693 = vmatprep.subr.bf16.mxu0 0
        %1694 = vmatpush2.bf16.msra.mxu0 0
        %1695 = vmatprep.subr.bf16.mxu0 0
        %1696 = vmatpush2.bf16.msra.mxu0 0
        %1697 = vmatprep.subr.bf16.mxu0 0
        %1698 = vmatpush2.bf16.msra.mxu0 0
        %1699 = vmatprep.subr.bf16.mxu0 0
        %1700 = vmatpush2.bf16.msra.mxu0 0
        %1701 = vmatprep.subr.bf16.mxu0 0
        %1702 = vmatpush2.bf16.msra.mxu0 0
        %1703 = vmatprep.subr.bf16.mxu0 0
        %1704 = vmatpush2.bf16.msra.mxu0 0
        %1705 = vmatprep.mubr.bf16.mxu0 0
        %1706 = vmatmul.mubr.bf16.gmra.mxu0 %v1607
        %v1707 = vpop.f32.mrf.mxu0
        %v1708 = vadd.f32 0.0, %v1707
        %v1709 = vpop.f32.mrf.mxu0
        %v1710 = vpop.f32.mrf.mxu0
        %v1711 = vadd.f32 0.0, %v1710
        %v1712 = vpop.f32.mrf.mxu0
        %1713 = vmatprep.mubr.bf16.mxu0 0
        %1714 = vmatmul.mubr.bf16.gmra.mxu0 %v1608
        %v1715 = vpop.f32.mrf.mxu0
        %v1716 = vadd.f32 0.0, %v1715
        %v1717 = vpop.f32.mrf.mxu0
        %v1718 = vpop.f32.mrf.mxu0
        %v1719 = vadd.f32 0.0, %v1718
        %v1720 = vpop.f32.mrf.mxu0
        %1721 = vdwg.mxu0
        %v1722 = vadd.f32 %v1381, %v1708
        %v1723 = vadd.f32 %v1382, %v1711
        %v1724 = vadd.f32 %v1383, %v1716
        %v1725 = vadd.f32 %v1384, %v1719
        %1726 = vst [vmem:[#allocation2] sm:$0xff] %v1722
        %1727 = vst [vmem:[#allocation2 + $0x8] sm:$0xff] %v1723
        %1728 = vst [vmem:[#allocation2 + $0x10] sm:$0xff] %v1724
        %1729 = vst [vmem:[#allocation2 + $0x18] sm:$0xff] %v1725
        %p1730 = scmp.eq.s32.totalorder %s39, 1
        // Predicated region
        $region93: #{_forward.1} parent=79 // pred_check
          %p1731 = pneg %p1730
        $region94: #{_forward.1} parent=79 // pred_check_branch
          %1733 = sbr.rel (%p1731) target = $region96
        $region95: #{_forward.1} parent=79 // pred_region
          %1734 = vst [vmem:[%s15] sm:$0xff] %v1722
          %1735 = vst [vmem:[%s15 + $0x8] sm:$0xff] %v1723
          %1736 = vst [vmem:[%s15 + $0x10] sm:$0xff] %v1724
          %1737 = vst [vmem:[%s15 + $0x18] sm:$0xff] %v1725
          %v1738 = vld [vmem:[%s2] sm:$0x3]
          %v1740 = vsel %vm1124, %v1738, 0
          %1742 = vmatprep.subr.mxu0 0.0
          %1743 = vmatpush1.msra.mxu0 0.0
          %1744 = vmatprep.subr.mxu0 0.0
          %1745 = vmatpush1.msra.mxu0 0.0
          %1746 = vmatprep.subr.mxu0 0.0
          %1747 = vmatpush1.msra.mxu0 0.0
          %1748 = vmatprep.subr.mxu0 0.0
          %1749 = vmatpush1.msra.mxu0 0.0
          %1750 = vmatprep.subr.mxu0 0.0
          %1751 = vmatpush1.msra.mxu0 0.0
          %1752 = vmatprep.subr.mxu0 0.0
          %1753 = vmatpush1.msra.mxu0 0.0
          %1754 = vmatprep.subr.mxu0 0.0
          %1755 = vmatpush1.msra.mxu0 0.0
          %1756 = vmatprep.subr.mxu0 0.0
          %1757 = vmatpush1.msra.mxu0 0.0
          %1758 = vmatprep.subr.mxu0 0.0
          %1759 = vmatpush1.msra.mxu0 0.0
          %1760 = vmatprep.subr.mxu0 0.0
          %1761 = vmatpush1.msra.mxu0 0.0
          %1762 = vmatprep.subr.mxu0 0.0
          %1763 = vmatpush1.msra.mxu0 0.0
          %1764 = vmatprep.subr.mxu0 0.0
          %1765 = vmatpush1.msra.mxu0 0.0
          %1766 = vmatprep.subr.mxu0 0.0
          %1767 = vmatpush1.msra.mxu0 %v1725
          %1768 = vmatprep.subr.mxu0 0.0
          %1769 = vmatpush1.msra.mxu0 %v1724
          %1770 = vmatprep.subr.mxu0 0.0
          %1771 = vmatpush1.msra.mxu0 %v1723
          %1772 = vmatprep.subr.mxu0 0.0
          %1773 = vmatpush1.msra.mxu0 %v1722
          %1774 = vmatprep.subr.mxu0 0.0
          %1775 = vmatpush2.msra.mxu0 0.0
          %1776 = vmatprep.subr.mxu0 0.0
          %1777 = vmatpush2.msra.mxu0 0.0
          %1778 = vmatprep.subr.mxu0 0.0
          %1779 = vmatpush2.msra.mxu0 0.0
          %1780 = vmatprep.subr.mxu0 0.0
          %1781 = vmatpush2.msra.mxu0 0.0
          %1782 = vmatprep.subr.mxu0 0.0
          %1783 = vmatpush2.msra.mxu0 0.0
          %1784 = vmatprep.subr.mxu0 0.0
          %1785 = vmatpush2.msra.mxu0 0.0
          %1786 = vmatprep.subr.mxu0 0.0
          %1787 = vmatpush2.msra.mxu0 0.0
          %1788 = vmatprep.subr.mxu0 0.0
          %1789 = vmatpush2.msra.mxu0 0.0
          %1790 = vmatprep.subr.mxu0 0.0
          %1791 = vmatpush2.msra.mxu0 0.0
          %1792 = vmatprep.subr.mxu0 0.0
          %1793 = vmatpush2.msra.mxu0 0.0
          %1794 = vmatprep.subr.mxu0 0.0
          %1795 = vmatpush2.msra.mxu0 0.0
          %1796 = vmatprep.subr.mxu0 0.0
          %1797 = vmatpush2.msra.mxu0 0.0
          %1798 = vmatprep.subr.mxu0 0.0
          %1799 = vmatpush2.msra.mxu0 0.0
          %1800 = vmatprep.subr.mxu0 0.0
          %1801 = vmatpush2.msra.mxu0 0.0
          %1802 = vmatprep.subr.mxu0 0.0
          %1803 = vmatpush2.msra.mxu0 0.0
          %1804 = vmatprep.subr.mxu0 0.0
          %1805 = vmatpush2.msra.mxu0 0.0
          %1806 = vmatprep.mubr.f32.mxu0 0.0
          %1807 = vmatmul.mubr.f32.gmra.mxu0 %v1740
          %v1808 = vpop.f32.mrf.mxu0
          %v1809 = vadd.f32 0.0, %v1808
          %v1810 = vpop.f32.mrf.mxu0
          %1811 = vdwg.mxu0
          %v1812 = vld [vmem:[%s9] sm:$0xff]
          %v1813 = vpack.c.bf16 %v1812, %v1812
          %v1814 = vld [vmem:[%s10] sm:$0xf]
          %v1815 = vld [vmem:[%s10 + $0x4] sm:$0xf]
          %v1816 = vld [vmem:[%s10 + $0x8] sm:$0xf]
          %v1817 = vld [vmem:[%s10 + $0xc] sm:$0xf]
          %v1818 = vld [vmem:[%s10 + $0x10] sm:$0xf]
          %v1819 = vld [vmem:[%s10 + $0x14] sm:$0xf]
          %v1820 = vld [vmem:[%s10 + $0x18] sm:$0xf]
          %v1821 = vld [vmem:[%s10 + $0x1c] sm:$0xf]
          %v1822 = vld [vmem:[%s10 + $0x20] sm:$0xf]
          %v1823 = vld [vmem:[%s10 + $0x24] sm:$0xf]
          %v1824 = vld [vmem:[%s10 + $0x28] sm:$0xf]
          %v1825 = vld [vmem:[%s10 + $0x2c] sm:$0xf]
          %v1826 = vld [vmem:[%s10 + $0x30] sm:$0xf]
          %v1827 = vld [vmem:[%s10 + $0x34] sm:$0xf]
          %v1828 = vld [vmem:[%s10 + $0x38] sm:$0xf]
          %v1829 = vld [vmem:[%s10 + $0x3c] sm:$0xf]
          %v1830 = vld [vmem:[%s11] sm:$0x1]
          %v1832 = vlaneseq
          %v1833 = vshrl.u32 %v1832, 7
          %v1834 = vsub.s32 0, %v1833
          %v1835 = vrot.slane %v1830, %v1834
          %v1853 = vunpack.c.l.b16 %v1814
          %v1854 = vunpack.c.l.b16 %v1815
          %v1855 = vunpack.c.l.b16 %v1816
          %v1856 = vunpack.c.l.b16 %v1817
          %v1857 = vunpack.c.l.b16 %v1818
          %v1858 = vunpack.c.l.b16 %v1819
          %v1859 = vunpack.c.l.b16 %v1820
          %v1860 = vunpack.c.l.b16 %v1821
          %v1861 = vunpack.c.l.b16 %v1822
          %v1862 = vunpack.c.l.b16 %v1823
          %v1863 = vunpack.c.l.b16 %v1824
          %v1864 = vunpack.c.l.b16 %v1825
          %v1865 = vunpack.c.l.b16 %v1826
          %v1866 = vunpack.c.l.b16 %v1827
          %v1867 = vunpack.c.l.b16 %v1828
          %v1868 = vunpack.c.l.b16 %v1829
          %v1869 = vpack.c.b16 %v1854, %v1853
          %v1870 = vpack.c.b16 %v1856, %v1855
          %v1871 = vpack.c.b16 %v1858, %v1857
          %v1872 = vpack.c.b16 %v1860, %v1859
          %v1873 = vpack.c.b16 %v1862, %v1861
          %v1874 = vpack.c.b16 %v1864, %v1863
          %v1875 = vpack.c.b16 %v1866, %v1865
          %v1876 = vpack.c.b16 %v1868, %v1867
          %1885 = vmatprep.subr.bf16.mxu0 0
          %1886 = vmatpush1.bf16.msra.mxu0 %v1876
          %1887 = vmatprep.subr.bf16.mxu0 0
          %1888 = vmatpush1.bf16.msra.mxu0 %v1875
          %1889 = vmatprep.subr.bf16.mxu0 0
          %1890 = vmatpush1.bf16.msra.mxu0 %v1874
          %1891 = vmatprep.subr.bf16.mxu0 0
          %1892 = vmatpush1.bf16.msra.mxu0 %v1873
          %1893 = vmatprep.subr.bf16.mxu0 0
          %1894 = vmatpush1.bf16.msra.mxu0 %v1872
          %1895 = vmatprep.subr.bf16.mxu0 0
          %1896 = vmatpush1.bf16.msra.mxu0 %v1871
          %1897 = vmatprep.subr.bf16.mxu0 0
          %1898 = vmatpush1.bf16.msra.mxu0 %v1870
          %1899 = vmatprep.subr.bf16.mxu0 0
          %1900 = vmatpush1.bf16.msra.mxu0 %v1869
          %1901 = vmatprep.subr.bf16.mxu0 0
          %1902 = vmatpush2.bf16.msra.mxu0 0
          %1903 = vmatprep.subr.bf16.mxu0 0
          %1904 = vmatpush2.bf16.msra.mxu0 0
          %1905 = vmatprep.subr.bf16.mxu0 0
          %1906 = vmatpush2.bf16.msra.mxu0 0
          %1907 = vmatprep.subr.bf16.mxu0 0
          %1908 = vmatpush2.bf16.msra.mxu0 0
          %1909 = vmatprep.subr.bf16.mxu0 0
          %1910 = vmatpush2.bf16.msra.mxu0 0
          %1911 = vmatprep.subr.bf16.mxu0 0
          %1912 = vmatpush2.bf16.msra.mxu0 0
          %1913 = vmatprep.subr.bf16.mxu0 0
          %1914 = vmatpush2.bf16.msra.mxu0 0
          %1915 = vmatprep.subr.bf16.mxu0 0
          %1916 = vmatpush2.bf16.msra.mxu0 0
          %1917 = vmatprep.mubr.bf16.mxu0 0
          %1918 = vmatmul.mubr.bf16.gmra.mxu0 %v1813
          %v1919 = vpop.f32.mrf.mxu0
          %v1920 = vadd.f32 %v1835, %v1919
          %v1921 = vpop.f32.mrf.mxu0
          %v1922 = vpop.f32.mrf.mxu0
          %v1923 = vpop.f32.mrf.mxu0
          %1924 = vdwg.mxu0
          %1925 = vst [vmem:[#allocation8] sm:$0xff] %v1920
          %v1926 = vld [vmem:[%s12] sm:$0x3]
          %vm1927 = vcmask 64512
          %v1929 = vsel %vm1927, %v1926, 0
          %1931 = vmatprep.subr.mxu0 0.0
          %1932 = vmatpush1.msra.mxu0 0.0
          %1933 = vmatprep.subr.mxu0 0.0
          %1934 = vmatpush1.msra.mxu0 0.0
          %1935 = vmatprep.subr.mxu0 0.0
          %1936 = vmatpush1.msra.mxu0 0.0
          %1937 = vmatprep.subr.mxu0 0.0
          %1938 = vmatpush1.msra.mxu0 0.0
          %1939 = vmatprep.subr.mxu0 0.0
          %1940 = vmatpush1.msra.mxu0 0.0
          %1941 = vmatprep.subr.mxu0 0.0
          %1942 = vmatpush1.msra.mxu0 0.0
          %1943 = vmatprep.subr.mxu0 0.0
          %1944 = vmatpush1.msra.mxu0 0.0
          %1945 = vmatprep.subr.mxu0 0.0
          %1946 = vmatpush1.msra.mxu0 0.0
          %1947 = vmatprep.subr.mxu0 0.0
          %1948 = vmatpush1.msra.mxu0 0.0
          %1949 = vmatprep.subr.mxu0 0.0
          %1950 = vmatpush1.msra.mxu0 0.0
          %1951 = vmatprep.subr.mxu0 0.0
          %1952 = vmatpush1.msra.mxu0 0.0
          %1953 = vmatprep.subr.mxu0 0.0
          %1954 = vmatpush1.msra.mxu0 0.0
          %1955 = vmatprep.subr.mxu0 0.0
          %1956 = vmatpush1.msra.mxu0 0.0
          %1957 = vmatprep.subr.mxu0 0.0
          %1958 = vmatpush1.msra.mxu0 0.0
          %1959 = vmatprep.subr.mxu0 0.0
          %1960 = vmatpush1.msra.mxu0 0.0
          %1961 = vmatprep.subr.mxu0 0.0
          %1962 = vmatpush1.msra.mxu0 %v1920
          %1963 = vmatprep.subr.mxu0 0.0
          %1964 = vmatpush2.msra.mxu0 0.0
          %1965 = vmatprep.subr.mxu0 0.0
          %1966 = vmatpush2.msra.mxu0 0.0
          %1967 = vmatprep.subr.mxu0 0.0
          %1968 = vmatpush2.msra.mxu0 0.0
          %1969 = vmatprep.subr.mxu0 0.0
          %1970 = vmatpush2.msra.mxu0 0.0
          %1971 = vmatprep.subr.mxu0 0.0
          %1972 = vmatpush2.msra.mxu0 0.0
          %1973 = vmatprep.subr.mxu0 0.0
          %1974 = vmatpush2.msra.mxu0 0.0
          %1975 = vmatprep.subr.mxu0 0.0
          %1976 = vmatpush2.msra.mxu0 0.0
          %1977 = vmatprep.subr.mxu0 0.0
          %1978 = vmatpush2.msra.mxu0 0.0
          %1979 = vmatprep.subr.mxu0 0.0
          %1980 = vmatpush2.msra.mxu0 0.0
          %1981 = vmatprep.subr.mxu0 0.0
          %1982 = vmatpush2.msra.mxu0 0.0
          %1983 = vmatprep.subr.mxu0 0.0
          %1984 = vmatpush2.msra.mxu0 0.0
          %1985 = vmatprep.subr.mxu0 0.0
          %1986 = vmatpush2.msra.mxu0 0.0
          %1987 = vmatprep.subr.mxu0 0.0
          %1988 = vmatpush2.msra.mxu0 0.0
          %1989 = vmatprep.subr.mxu0 0.0
          %1990 = vmatpush2.msra.mxu0 0.0
          %1991 = vmatprep.subr.mxu0 0.0
          %1992 = vmatpush2.msra.mxu0 0.0
          %1993 = vmatprep.subr.mxu0 0.0
          %1994 = vmatpush2.msra.mxu0 0.0
          %1995 = vmatprep.mubr.f32.mxu0 0.0
          %1996 = vmatmul.mubr.f32.gmra.mxu0 %v1929
          %v1997 = vpop.f32.mrf.mxu0
          %v1998 = vadd.f32 0.0, %v1997
          %v1999 = vpop.f32.mrf.mxu0
          %2000 = vdwg.mxu0
          %2001 = vst [vmem:[#allocation9] sm:$0x3] %v1998
          %v2002 = vmul.f32 %v1809, %v1809
          %vm2003 = vcmask 1041408
          %v2004 = vsel %vm2003, %v2002, 0.0
          %2005 = vadd.xlane.f32.xlu0 %v2004
          %v2006 = vpop.xlane.xlu0 %2005
          %v2007 = vadd.f32 %v2006, 1e-06
          %v2008 = vrsqrt.pop %v2007
          %v2009 = vmul.f32 %v1809, %v2008
          %v2010 = vmul.f32 %v1920, %v1920
          %2011 = vadd.xlane.f32.xlu0 %v2010
          %v2012 = vpop.xlane.xlu0 %2011
          %v2013 = vadd.f32 %v2012, 1e-06
          %v2014 = vrsqrt.pop %v2013
          %v2015 = vmul.f32 %v1920, %v2014
          %v2016 = vld [vmem:[%s13] sm:$0xff]
          %vm2017 = vcmask 15360
          %v2019 = vsel %vm2017, %v2016, 0
          %v2022 = vsel %vm2003, %v2009, 0
          %2024 = vmatprep.subr.mxu0 0.0
          %2025 = vmatpush1.msra.mxu0 0.0
          %2026 = vmatprep.subr.mxu0 0.0
          %2027 = vmatpush1.msra.mxu0 0.0
          %2028 = vmatprep.subr.mxu0 0.0
          %2029 = vmatpush1.msra.mxu0 0.0
          %2030 = vmatprep.subr.mxu0 0.0
          %2031 = vmatpush1.msra.mxu0 0.0
          %2032 = vmatprep.subr.mxu0 0.0
          %2033 = vmatpush1.msra.mxu0 0.0
          %2034 = vmatprep.subr.mxu0 0.0
          %2035 = vmatpush1.msra.mxu0 0.0
          %2036 = vmatprep.subr.mxu0 0.0
          %2037 = vmatpush1.msra.mxu0 0.0
          %2038 = vmatprep.subr.mxu0 0.0
          %2039 = vmatpush1.msra.mxu0 0.0
          %2040 = vmatprep.subr.mxu0 0.0
          %2041 = vmatpush1.msra.mxu0 0.0
          %2042 = vmatprep.subr.mxu0 0.0
          %2043 = vmatpush1.msra.mxu0 0.0
          %2044 = vmatprep.subr.mxu0 0.0
          %2045 = vmatpush1.msra.mxu0 0.0
          %2046 = vmatprep.subr.mxu0 0.0
          %2047 = vmatpush1.msra.mxu0 0.0
          %2048 = vmatprep.subr.mxu0 0.0
          %2049 = vmatpush1.msra.mxu0 0.0
          %2050 = vmatprep.subr.mxu0 0.0
          %2051 = vmatpush1.msra.mxu0 0.0
          %2052 = vmatprep.subr.mxu0 0.0
          %2053 = vmatpush1.msra.mxu0 0.0
          %2054 = vmatprep.subr.mxu0 0.0
          %2055 = vmatpush1.msra.mxu0 %v2022
          %2056 = vmatprep.subr.mxu0 0.0
          %2057 = vmatpush2.msra.mxu0 0.0
          %2058 = vmatprep.subr.mxu0 0.0
          %2059 = vmatpush2.msra.mxu0 0.0
          %2060 = vmatprep.subr.mxu0 0.0
          %2061 = vmatpush2.msra.mxu0 0.0
          %2062 = vmatprep.subr.mxu0 0.0
          %2063 = vmatpush2.msra.mxu0 0.0
          %2064 = vmatprep.subr.mxu0 0.0
          %2065 = vmatpush2.msra.mxu0 0.0
          %2066 = vmatprep.subr.mxu0 0.0
          %2067 = vmatpush2.msra.mxu0 0.0
          %2068 = vmatprep.subr.mxu0 0.0
          %2069 = vmatpush2.msra.mxu0 0.0
          %2070 = vmatprep.subr.mxu0 0.0
          %2071 = vmatpush2.msra.mxu0 0.0
          %2072 = vmatprep.subr.mxu0 0.0
          %2073 = vmatpush2.msra.mxu0 0.0
          %2074 = vmatprep.subr.mxu0 0.0
          %2075 = vmatpush2.msra.mxu0 0.0
          %2076 = vmatprep.subr.mxu0 0.0
          %2077 = vmatpush2.msra.mxu0 0.0
          %2078 = vmatprep.subr.mxu0 0.0
          %2079 = vmatpush2.msra.mxu0 0.0
          %2080 = vmatprep.subr.mxu0 0.0
          %2081 = vmatpush2.msra.mxu0 0.0
          %2082 = vmatprep.subr.mxu0 0.0
          %2083 = vmatpush2.msra.mxu0 0.0
          %2084 = vmatprep.subr.mxu0 0.0
          %2085 = vmatpush2.msra.mxu0 0.0
          %2086 = vmatprep.subr.mxu0 0.0
          %2087 = vmatpush2.msra.mxu0 0.0
          %2088 = vmatprep.mubr.f32.mxu0 0.0
          %2089 = vmatmul.mubr.f32.gmra.mxu0 %v2019
          %v2090 = vpop.f32.mrf.mxu0
          %v2091 = vadd.f32 0.0, %v2090
          %v2092 = vpop.f32.mrf.mxu0
          %2093 = vdwg.mxu0
          %v2094 = vmul.f32 %v2015, %v2091
          %2095 = vadd.xlane.f32.xlu0 %v2094
          %v2096 = vpop.xlane.xlu0 %2095
          %vm2097 = vcmask 7168
          %2098 = vst.msk [vmem:[%s18] sm:$0xff] %vm2097, %v2096
          %v2099 = vld [vmem:[%s14] sm:$0xff]
          %v2100 = vsub.f32 %v2096, %v2099
          %v2101 = vmul.f32 %v2100, %v2100
          %v2102 = vsel %vm2097, %v2101, 0.0
          %2103 = vadd.xlane.f32.xlu0 %v2102
          %v2104 = vpop.xlane.xlu0 %2103
          %v2105 = vrot.slane %v2104, 4
          %v2106 = vadd.f32 %v2104, %v2105
          %v2107 = vrot.slane %v2106, 2
          %v2108 = vadd.f32 %v2106, %v2107
          %v2109 = vrot.slane %v2108, 1
          %v2110 = vadd.f32 %v2108, %v2109
          %s2111 = vtos %v2110
          %v2112 = vrcp.pop 8.0
          %s2113 = vtos %v2112
          %s2114 = smul.f32 %s2111, %s2113
          %v2115 = vstv %s2114
          %vm2116 = vcmask 0
          %2117 = vst.msk [vmem:[#allocation11] sm:$0x1] %vm2116, %v2115
        $region96: #{_forward.1} parent=79 // pred_fallthru
          _
        // Predicated region
        $region97: #{_forward.1} parent=79 // pred_check
          %p2118 = pneg %p397
        $region98: #{_forward.1} parent=79 // pred_check_branch
          %2120 = sbr.rel (%p2118) target = $region100
        $region99: #{_forward.1} parent=79 // pred_region
          _
        $region100: #{_forward.1} parent=79 // pred_fallthru
          _
        // Predicated region
        $region101: #{_forward.1} parent=79 // pred_check
          %p2121 = pneg %p418
        $region102: #{_forward.1} parent=79 // pred_check_branch
          %2123 = sbr.rel (%p2121) target = $region104
        $region103: #{_forward.1} parent=79 // pred_region
          %s2125 = ssub.s32 128, 128
          %2126 = vsyncadd [#allocation5], %s2125
          %s2128 = sshll.u32 [#allocation8], 4
          %s2129 = int_to_ptr.vmem [resolvable:$true] %s2128
          %2131 = dma.vmem_to_hbm [thread:$0]  %s2129, 128, %s16, [#allocation5]
        $region104: #{_forward.1} parent=79 // pred_fallthru
          _
        // Predicated region
        $region105: #{_forward.1} parent=79 // pred_check
          %p2132 = pneg %p439
        $region106: #{_forward.1} parent=79 // pred_check_branch
          %2134 = sbr.rel (%p2132) target = $region108
        $region107: #{_forward.1} parent=79 // pred_region
          %s2136 = ssub.s32 32, 32
          %2137 = vsyncadd [#allocation10], %s2136
          %s2139 = sshll.u32 [#allocation9], 4
          %s2140 = int_to_ptr.vmem [resolvable:$true] %s2139
          %2142 = dma.vmem_to_hbm [thread:$0]  %s2140, 32, %s17, [#allocation10]
        $region108: #{_forward.1} parent=79 // pred_fallthru
          _
        // Predicated region
        $region109: #{_forward.1} parent=79 // pred_check
          %p2143 = pneg %p460
        $region110: #{_forward.1} parent=79 // pred_check_branch
          %2145 = sbr.rel (%p2143) target = $region112
        $region111: #{_forward.1} parent=79 // pred_region
          _
        $region112: #{_forward.1} parent=79 // pred_fallthru
          _
        // Predicated region
        $region113: #{_forward.1} parent=79 // pred_check
          %p2146 = pneg %p481
        $region114: #{_forward.1} parent=79 // pred_check_branch
          %2148 = sbr.rel (%p2146) target = $region116
        $region115: #{_forward.1} parent=79 // pred_region
          %s2150 = ssub.s32 16, 16
          %2151 = vsyncadd [#allocation10], %s2150
          %s2153 = sshll.u32 [#allocation11], 4
          %s2154 = int_to_ptr.vmem [resolvable:$true] %s2153
          %2156 = dma.vmem_to_hbm [thread:$0]  %s2154, 16, %s19, [#allocation10]
        $region116: #{_forward.1} parent=79 // pred_fallthru
          _
        // Predicated region
        $region117: #{_forward.1} parent=79 // pred_check
          %p2157 = pneg %p397
        $region118: #{_forward.1} parent=79 // pred_check_branch
          %2159 = sbr.rel (%p2157) target = $region120
        $region119: #{_forward.1} parent=79 // pred_region
          _
        $region120: #{_forward.1} parent=79 // pred_fallthru
          _
        // Predicated region
        $region121: #{_forward.1} parent=79 // pred_check
          %p2160 = pneg %p418
        $region122: #{_forward.1} parent=79 // pred_check_branch
          %2162 = sbr.rel (%p2160) target = $region124
        $region123: #{_forward.1} parent=79 // pred_region
          %2163 = dma.done [#allocation5], 128
        $region124: #{_forward.1} parent=79 // pred_fallthru
          _
        // Predicated region
        $region125: #{_forward.1} parent=79 // pred_check
          %p2164 = pneg %p439
        $region126: #{_forward.1} parent=79 // pred_check_branch
          %2166 = sbr.rel (%p2164) target = $region128
        $region127: #{_forward.1} parent=79 // pred_region
          %2167 = dma.done [#allocation10], 32
        $region128: #{_forward.1} parent=79 // pred_fallthru
          _
        // Predicated region
        $region129: #{_forward.1} parent=79 // pred_check
          %p2168 = pneg %p460
        $region130: #{_forward.1} parent=79 // pred_check_branch
          %2170 = sbr.rel (%p2168) target = $region132
        $region131: #{_forward.1} parent=79 // pred_region
          _
        $region132: #{_forward.1} parent=79 // pred_fallthru
          _
        // Predicated region
        $region133: #{_forward.1} parent=79 // pred_check
          %p2171 = pneg %p481
        $region134: #{_forward.1} parent=79 // pred_check_branch
          %2173 = sbr.rel (%p2171) target = $region136
        $region135: #{_forward.1} parent=79 // pred_region
          %2174 = dma.done [#allocation10], 16
        $region136: #{_forward.1} parent=79 // pred_fallthru
          _
      $region80: #{_forward.1} parent=5 // pred_fallthru
        _
      %p2175 = scmp.le.s32.totalorder 2, %s34
      // Predicated region
      $region137: #{_forward.1} parent=5 // pred_check
        %p2176 = pneg %p2175
      $region138: #{_forward.1} parent=5 // pred_check_branch
        %2178 = sbr.rel (%p2176) target = $region140
      $region139: #{_forward.1} parent=5 // pred_region
        %s2179 = ssub.s32 %s34, 2
      $region140: #{_forward.1} parent=5 // pred_fallthru
        _
    $region6: #{_forward.1} parent=1 // loop_footer
      %s38 = sadd.s32 1, %s34
    $region7: #{_forward.1} parent=1 // loop_footer_branch
      %33 = sbr.rel target = $region3
    $region8: #{_forward.1} parent=1 // loop_exit
      _
    %2180 = vsyncpa [#allocation4], 1
    %s2181 = scalar_lea.sflag [#allocation4], 1
    %2182 = vsyncpa %s2181, 1
    %2183 = vsyncpa [#allocation7], 1
    %s2184 = scalar_lea.sflag [#allocation7], 1
    %2185 = vsyncpa %s2184, 1
    %2186 = vsyncpa [#allocation5], 1
    %s2187 = scalar_lea.sflag [#allocation5], 1
    %2188 = vsyncpa %s2187, 1
    %2189 = vsyncpa [#allocation10], 1

</llo_original>
